<compile_context>
chip_gen: v7x
topology: tpu7x:2x2x1
jax: 0.10.0
libtpu: 0.0.40
codegen_flags: <defaults>
</compile_context>

<pallas_src>
import functools

import jax
import jax.numpy as jnp
from jax import lax
from jax.experimental import pallas as pl
from jax.experimental.pallas import tpu as pltpu


def _round_up(x, m):
    return (x + m - 1) // m * m


def sku_kernel(
    ids_ref,    # (T*Bp, 1) int32  token ids, time-major, batch-padded
    cat_ref,    # (Bp, C)   f32    categorical input (batch-padded)
    gtbl_ref,   # (Vp, 4H)  f32    embedding @ W_ih^T + b_ih + b_hh  (vocab-padded)
    whh_ref,    # (H, 4H)   f32    LSTM hidden weights (transposed)
    w1c_ref,    # (C, F1)   f32    fc1 columns acting on cat_input
    w1h_ref,    # (H, F1)   f32    fc1 columns acting on last hidden state
    b1_ref,     # (1, F1)
    w2_ref,     # (F1, NCp) f32    fc2 weights, output-padded to 128 lanes
    b2_ref,     # (1, NCp)
    out_ref,    # (Bp, NCp)
):
    TB = ids_ref.shape[0]
    Vp, H4 = gtbl_ref.shape
    H = H4 // 4
    B = cat_ref.shape[0]
    T = TB // B

    # ---- fused embedding gather + LSTM input projection: ONE MXU matmul ----
    # one_hot(ids) @ (emb_table @ W_ih^T + b)  ==  emb_table[ids] @ W_ih^T + b
    ids = ids_ref[...]                                                   # (TB, 1)
    onehot = (lax.broadcasted_iota(jnp.int32, (TB, Vp), 1) == ids).astype(jnp.float32)
    xp = jnp.dot(onehot, gtbl_ref[...], preferred_element_type=jnp.float32)  # (TB, 4H)

    whh = whh_ref[...]                                                   # (H, 4H)
    lane = lax.broadcasted_iota(jnp.int32, (B, H4), 1)
    g_lanes = (lane >= 2 * H) & (lane < 3 * H)                           # tanh-gate lanes

    h = jnp.zeros((B, H), jnp.float32)
    c = jnp.zeros((B, H), jnp.float32)
    # Fully static unroll (T is small & static); slices of xp are static & sublane-aligned.
    for t in range(T):
        gates = xp[t * B:(t + 1) * B, :] + jnp.dot(
            h, whh, preferred_element_type=jnp.float32)                  # (Bp, 4H) = 1 vreg
        # Full-vreg EUP transcendentals + lane-mask select (PyTorch gate order: i, f, g, o).
        sig = jax.nn.sigmoid(gates)
        tnh = jnp.tanh(gates)
        act = jnp.where(g_lanes, tnh, sig)
        i_g = act[:, 0:H]
        f_g = act[:, H:2 * H]
        g_g = act[:, 2 * H:3 * H]
        o_g = act[:, 3 * H:4 * H]
        c = f_g * c + i_g * g_g
        h = o_g * jnp.tanh(c)

    # ---- head: fc1 over concat(cat, h_last) done as split matmuls (no concat) ----
    x = (
        jnp.dot(cat_ref[...], w1c_ref[...], preferred_element_type=jnp.float32)
        + jnp.dot(h, w1h_ref[...], preferred_element_type=jnp.float32)
        + b1_ref[...]
    )
    x = jnp.maximum(x, 0.0)   # ReLU; Dropout(p=0.5) = identity in eval mode
    # TODO(synk): training-mode dropout (p=0.5) is not implemented (eval semantics only).
    out_ref[...] = (
        jnp.dot(x, w2_ref[...], preferred_element_type=jnp.float32) + b2_ref[...]
    )


def init_params(key, cat_input_size, vocab_size, embedding_dim, hidden_size,
                num_classes, fc1_size=128):
    ks = jax.random.split(key, 9)
    H, E, C, NC, F1 = hidden_size, embedding_dim, cat_input_size, num_classes, fc1_size
    s = 0.1
    return {
        "embedding": jax.random.normal(ks[0], (vocab_size, E), jnp.float32) * s,
        # PyTorch nn.LSTM parameter shapes: W_ih (4H, E), W_hh (4H, H), biases (4H,)
        "w_ih": jax.random.normal(ks[1], (4 * H, E), jnp.float32) * s,
        "w_hh": jax.random.normal(ks[2], (4 * H, H), jnp.float32) * s,
        "b_ih": jax.random.normal(ks[3], (4 * H,), jnp.float32) * s,
        "b_hh": jax.random.normal(ks[4], (4 * H,), jnp.float32) * s,
        # fc1: Linear(H + C, 128), input ordering is [cat_input, lstm_out]
        "w_fc1": jax.random.normal(ks[5], (F1, C + H), jnp.float32) * s,
        "b_fc1": jax.random.normal(ks[6], (F1,), jnp.float32) * s,
        "w_fc2": jax.random.normal(ks[7], (NC, F1), jnp.float32) * s,
        "b_fc2": jnp.zeros((NC,), jnp.float32),
    }


def pack_params(params, cat_input_size):
    """One-time weight prep: fuses, transposes, splits, and pads all weights so the
    per-call jitted path does no weight-side XLA ops at all."""
    C = cat_input_size
    H = params["w_hh"].shape[1]
    V = params["embedding"].shape[0]
    F1 = params["b_fc1"].shape[0]
    NC = params["b_fc2"].shape[0]
    Vp = _round_up(V, 8)
    NCp = _round_up(NC, 128)

    # Fuse the embedding table with the LSTM input projection + combined bias.
    gate_tbl = (params["embedding"] @ params["w_ih"].T
                + params["b_ih"] + params["b_hh"])                       # (V, 4H)
    gate_tbl = jnp.pad(gate_tbl, ((0, Vp - V), (0, 0)))

    w_fc1 = params["w_fc1"]                                              # (F1, C + H)
    packed = {
        "gate_tbl": gate_tbl.astype(jnp.float32),                        # (Vp, 4H)
        "w_hh_t": params["w_hh"].T.astype(jnp.float32),                  # (H, 4H)
        "w1_cat": w_fc1[:, :C].T.astype(jnp.float32),                    # (C, F1)
        "w1_h": w_fc1[:, C:].T.astype(jnp.float32),                      # (H, F1)
        "b_fc1": params["b_fc1"].reshape(1, F1).astype(jnp.float32),
        "w_fc2": jnp.pad(params["w_fc2"].T,
                         ((0, 0), (0, NCp - NC))).astype(jnp.float32),   # (F1, NCp)
        "b_fc2": jnp.pad(params["b_fc2"],
                         (0, NCp - NC)).reshape(1, NCp).astype(jnp.float32),
    }
    return jax.tree_util.tree_map(jnp.asarray, packed)


@functools.partial(jax.jit, static_argnames=("num_classes",))
def sku_forward(packed, cat_input, text_input, *, num_classes):
    """Glue: tiny int-id plumbing + batch padding, then one Pallas kernel."""
    B, T = text_input.shape
    C = cat_input.shape[1]
    Vp, H4 = packed["gate_tbl"].shape
    H = H4 // 4
    F1 = packed["b_fc1"].shape[1]
    NCp = packed["b_fc2"].shape[1]
    Bp = _round_up(max(B, 8), 8)                     # pad batch to the sublane width

    # Token ids: batch-pad, time-major flatten (cheap int32 ops on a (B,T) array).
    ids = jnp.pad(text_input.astype(jnp.int32), ((0, Bp - B), (0, 0)))   # (Bp, T)
    ids_tm = jnp.transpose(ids, (1, 0)).reshape(T * Bp, 1)               # (T*Bp, 1)
    cat_p = jnp.pad(cat_input.astype(jnp.float32), ((0, Bp - B), (0, 0)))  # (Bp, C)

    args = (
        ids_tm, cat_p,
        packed["gate_tbl"], packed["w_hh_t"],
        packed["w1_cat"], packed["w1_h"], packed["b_fc1"],
        packed["w_fc2"], packed["b_fc2"],
    )

    flops = int(
        2 * T * Bp * Vp * H4                 # fused gather + input projection
        + 2 * T * Bp * H * H4                # recurrence h @ W_hh
        + 2 * Bp * (C * F1 + H * F1 + F1 * NCp)
    )
    transcendentals = int(T * Bp * (2 * H4 + H))     # sigmoid+tanh full tile + tanh(c)
    bytes_accessed = int(
        4 * (T * Bp + Bp * C + Vp * H4 + H * H4
             + C * F1 + H * F1 + F1 + F1 * NCp + NCp + Bp * NCp)
    )

    vmem = pl.BlockSpec(memory_space=pltpu.MemorySpace.VMEM)
    out = pl.pallas_call(
        sku_kernel,
        out_shape=jax.ShapeDtypeStruct((Bp, NCp), jnp.float32),
        in_specs=[vmem] * len(args),
        out_specs=vmem,
        cost_estimate=pl.CostEstimate(
            flops=flops,
            transcendentals=transcendentals,
            bytes_accessed=bytes_accessed,
        ),
    )(*args)
    return out[:B, :num_classes]


def reference_forward(params, cat_input, text_input):
    """Pure-JAX reference matching the PyTorch SKUNNModel forward (eval mode)."""
    emb = params["embedding"][text_input]                 # (B, T, E)
    B, T, _ = emb.shape
    H = params["w_hh"].shape[1]
    h = jnp.zeros((B, H), jnp.float32)
    c = jnp.zeros((B, H), jnp.float32)
    for t in range(T):
        gates = (emb[:, t, :] @ params["w_ih"].T + params["b_ih"]
                 + h @ params["w_hh"].T + params["b_hh"])
        i = jax.nn.sigmoid(gates[:, 0:H])
        f = jax.nn.sigmoid(gates[:, H:2 * H])
        g = jnp.tanh(gates[:, 2 * H:3 * H])
        o = jax.nn.sigmoid(gates[:, 3 * H:4 * H])
        c = f * c + i * g
        h = o * jnp.tanh(c)
    combined = jnp.concatenate([cat_input, h], axis=1)
    x = jnp.maximum(combined @ params["w_fc1"].T + params["b_fc1"], 0.0)
    return x @ params["w_fc2"].T + params["b_fc2"]


if __name__ == "__main__":
    # Small, forward-consistent shapes.
    cat_input_size = 6
    vocab_size = 50
    embedding_dim = 16
    hidden_size = 32        # 4H = 128 -> the gate tile is exactly one (8,128) vreg
    num_classes = 10
    batch = 4
    seq_len = 8

    key = jax.random.PRNGKey(0)
    k_params, k_cat, k_text = jax.random.split(key, 3)

    params = init_params(k_params, cat_input_size, vocab_size, embedding_dim,
                         hidden_size, num_classes)
    packed = pack_params(params, cat_input_size)          # one-time weight prep

    cat_input = jax.random.normal(k_cat, (batch, cat_input_size), jnp.float32)
    text_input = jax.random.randint(k_text, (batch, seq_len), 0, vocab_size,
                                    dtype=jnp.int32)

    logits = sku_forward(packed, cat_input, text_input, num_classes=num_classes)
    logits = jax.block_until_ready(logits)

    ref = reference_forward(params, cat_input, text_input)
    assert logits.shape == (batch, num_classes)
    assert jnp.all(jnp.isfinite(logits))
    assert jnp.allclose(logits, ref, atol=2e-3, rtol=2e-3)

    print("KERNEL_OK")
</pallas_src>

<mosaic_0001>
module attributes {stable_mosaic.version = 11 : i64} {
  func.func @sku_kernel(%arg0: memref<64x1xi32, #tpu.memory_space<vmem>>, %arg1: memref<8x6xf32, #tpu.memory_space<vmem>>, %arg2: memref<56x128xf32, #tpu.memory_space<vmem>>, %arg3: memref<32x128xf32, #tpu.memory_space<vmem>>, %arg4: memref<6x128xf32, #tpu.memory_space<vmem>>, %arg5: memref<32x128xf32, #tpu.memory_space<vmem>>, %arg6: memref<1x128xf32, #tpu.memory_space<vmem>>, %arg7: memref<128x128xf32, #tpu.memory_space<vmem>>, %arg8: memref<1x128xf32, #tpu.memory_space<vmem>>, %arg9: memref<8x128xf32, #tpu.memory_space<vmem>>) attributes {dimension_semantics = [], scalar_prefetch = 0 : i64, scratch_operands = 0 : i64, tpu.core_type = #tpu.core_type<tc>} {
    %c0 = arith.constant 0 : index
    %c0_0 = arith.constant 0 : index
    %0 = vector.load %arg0[%c0, %c0_0] : memref<64x1xi32, #tpu.memory_space<vmem>>, vector<64x1xi32>
    %1 = tpu.iota {dimensions = array<i32: 1>} : vector<64x56xi32>
    %2 = vector.broadcast %0 : vector<64x1xi32> to vector<64x56xi32>
    %3 = arith.cmpi eq, %1, %2 : vector<64x56xi32>
    %4 = arith.extui %3 : vector<64x56xi1> to vector<64x56xi32>
    %5 = arith.sitofp %4 : vector<64x56xi32> to vector<64x56xf32>
    %c0_1 = arith.constant 0 : index
    %c0_2 = arith.constant 0 : index
    %6 = vector.load %arg2[%c0_1, %c0_2] : memref<56x128xf32, #tpu.memory_space<vmem>>, vector<56x128xf32>
    %cst = arith.constant dense<0.000000e+00> : vector<64x128xf32>
    %7 = tpu.matmul %5, %6, %cst {dimension_numbers = #tpu.dot_dimension_numbers<[1], [0], [0], [1], [0, 0, 1, 1], [], []>} : vector<64x56xf32>, vector<56x128xf32>, vector<64x128xf32> -> vector<64x128xf32>
    %c0_3 = arith.constant 0 : index
    %c0_4 = arith.constant 0 : index
    %8 = vector.load %arg3[%c0_3, %c0_4] : memref<32x128xf32, #tpu.memory_space<vmem>>, vector<32x128xf32>
    %9 = tpu.iota {dimensions = array<i32: 1>} : vector<8x128xi32>
    %c64_i32 = arith.constant 64 : i32
    %10 = vector.broadcast %c64_i32 : i32 to vector<8x128xi32>
    %11 = arith.cmpi sge, %9, %10 : vector<8x128xi32>
    %c96_i32 = arith.constant 96 : i32
    %12 = vector.broadcast %c96_i32 : i32 to vector<8x128xi32>
    %13 = arith.cmpi slt, %9, %12 : vector<8x128xi32>
    %14 = arith.andi %11, %13 : vector<8x128xi1>
    %cst_5 = arith.constant 0.000000e+00 : f32
    %15 = vector.broadcast %cst_5 : f32 to vector<8x32xf32>
    %cst_6 = arith.constant 0.000000e+00 : f32
    %16 = vector.broadcast %cst_6 : f32 to vector<8x32xf32>
    %17 = vector.extract_strided_slice %7 {offsets = [0, 0], sizes = [8, 128], strides = [1, 1]} : vector<64x128xf32> to vector<8x128xf32>
    %cst_7 = arith.constant dense<0.000000e+00> : vector<8x128xf32>
    %18 = tpu.matmul %15, %8, %cst_7 {dimension_numbers = #tpu.dot_dimension_numbers<[1], [0], [0], [1], [0, 0, 1, 1], [], []>} : vector<8x32xf32>, vector<32x128xf32>, vector<8x128xf32> -> vector<8x128xf32>
    %19 = arith.addf %17, %18 : vector<8x128xf32>
    %20 = arith.negf %19 : vector<8x128xf32>
    %21 = math.exp %20 : vector<8x128xf32>
    %cst_8 = arith.constant 1.000000e+00 : f32
    %22 = vector.broadcast %cst_8 : f32 to vector<8x128xf32>
    %23 = arith.addf %22, %21 : vector<8x128xf32>
    %24 = arith.divf %22, %23 : vector<8x128xf32>
    %25 = math.tanh %19 : vector<8x128xf32>
    %26 = arith.select %14, %25, %24 : vector<8x128xi1>, vector<8x128xf32>
    %27 = vector.extract_strided_slice %26 {offsets = [0, 0], sizes = [8, 32], strides = [1, 1]} : vector<8x128xf32> to vector<8x32xf32>
    %28 = vector.extract_strided_slice %26 {offsets = [0, 32], sizes = [8, 32], strides = [1, 1]} : vector<8x128xf32> to vector<8x32xf32>
    %29 = vector.extract_strided_slice %26 {offsets = [0, 64], sizes = [8, 32], strides = [1, 1]} : vector<8x128xf32> to vector<8x32xf32>
    %30 = vector.extract_strided_slice %26 {offsets = [0, 96], sizes = [8, 32], strides = [1, 1]} : vector<8x128xf32> to vector<8x32xf32>
    %31 = arith.mulf %28, %16 : vector<8x32xf32>
    %32 = arith.mulf %27, %29 : vector<8x32xf32>
    %33 = arith.addf %31, %32 : vector<8x32xf32>
    %34 = math.tanh %33 : vector<8x32xf32>
    %35 = arith.mulf %30, %34 : vector<8x32xf32>
    %36 = vector.extract_strided_slice %7 {offsets = [8, 0], sizes = [8, 128], strides = [1, 1]} : vector<64x128xf32> to vector<8x128xf32>
    %cst_9 = arith.constant dense<0.000000e+00> : vector<8x128xf32>
    %37 = tpu.matmul %35, %8, %cst_9 {dimension_numbers = #tpu.dot_dimension_numbers<[1], [0], [0], [1], [0, 0, 1, 1], [], []>} : vector<8x32xf32>, vector<32x128xf32>, vector<8x128xf32> -> vector<8x128xf32>
    %38 = arith.addf %36, %37 : vector<8x128xf32>
    %39 = arith.negf %38 : vector<8x128xf32>
    %40 = math.exp %39 : vector<8x128xf32>
    %cst_10 = arith.constant 1.000000e+00 : f32
    %41 = vector.broadcast %cst_10 : f32 to vector<8x128xf32>
    %42 = arith.addf %41, %40 : vector<8x128xf32>
    %43 = arith.divf %41, %42 : vector<8x128xf32>
    %44 = math.tanh %38 : vector<8x128xf32>
    %45 = arith.select %14, %44, %43 : vector<8x128xi1>, vector<8x128xf32>
    %46 = vector.extract_strided_slice %45 {offsets = [0, 0], sizes = [8, 32], strides = [1, 1]} : vector<8x128xf32> to vector<8x32xf32>
    %47 = vector.extract_strided_slice %45 {offsets = [0, 32], sizes = [8, 32], strides = [1, 1]} : vector<8x128xf32> to vector<8x32xf32>
    %48 = vector.extract_strided_slice %45 {offsets = [0, 64], sizes = [8, 32], strides = [1, 1]} : vector<8x128xf32> to vector<8x32xf32>
    %49 = vector.extract_strided_slice %45 {offsets = [0, 96], sizes = [8, 32], strides = [1, 1]} : vector<8x128xf32> to vector<8x32xf32>
    %50 = arith.mulf %47, %33 : vector<8x32xf32>
    %51 = arith.mulf %46, %48 : vector<8x32xf32>
    %52 = arith.addf %50, %51 : vector<8x32xf32>
    %53 = math.tanh %52 : vector<8x32xf32>
    %54 = arith.mulf %49, %53 : vector<8x32xf32>
    %55 = vector.extract_strided_slice %7 {offsets = [16, 0], sizes = [8, 128], strides = [1, 1]} : vector<64x128xf32> to vector<8x128xf32>
    %cst_11 = arith.constant dense<0.000000e+00> : vector<8x128xf32>
    %56 = tpu.matmul %54, %8, %cst_11 {dimension_numbers = #tpu.dot_dimension_numbers<[1], [0], [0], [1], [0, 0, 1, 1], [], []>} : vector<8x32xf32>, vector<32x128xf32>, vector<8x128xf32> -> vector<8x128xf32>
    %57 = arith.addf %55, %56 : vector<8x128xf32>
    %58 = arith.negf %57 : vector<8x128xf32>
    %59 = math.exp %58 : vector<8x128xf32>
    %cst_12 = arith.constant 1.000000e+00 : f32
    %60 = vector.broadcast %cst_12 : f32 to vector<8x128xf32>
    %61 = arith.addf %60, %59 : vector<8x128xf32>
    %62 = arith.divf %60, %61 : vector<8x128xf32>
    %63 = math.tanh %57 : vector<8x128xf32>
    %64 = arith.select %14, %63, %62 : vector<8x128xi1>, vector<8x128xf32>
    %65 = vector.extract_strided_slice %64 {offsets = [0, 0], sizes = [8, 32], strides = [1, 1]} : vector<8x128xf32> to vector<8x32xf32>
    %66 = vector.extract_strided_slice %64 {offsets = [0, 32], sizes = [8, 32], strides = [1, 1]} : vector<8x128xf32> to vector<8x32xf32>
    %67 = vector.extract_strided_slice %64 {offsets = [0, 64], sizes = [8, 32], strides = [1, 1]} : vector<8x128xf32> to vector<8x32xf32>
    %68 = vector.extract_strided_slice %64 {offsets = [0, 96], sizes = [8, 32], strides = [1, 1]} : vector<8x128xf32> to vector<8x32xf32>
    %69 = arith.mulf %66, %52 : vector<8x32xf32>
    %70 = arith.mulf %65, %67 : vector<8x32xf32>
    %71 = arith.addf %69, %70 : vector<8x32xf32>
    %72 = math.tanh %71 : vector<8x32xf32>
    %73 = arith.mulf %68, %72 : vector<8x32xf32>
    %74 = vector.extract_strided_slice %7 {offsets = [24, 0], sizes = [8, 128], strides = [1, 1]} : vector<64x128xf32> to vector<8x128xf32>
    %cst_13 = arith.constant dense<0.000000e+00> : vector<8x128xf32>
    %75 = tpu.matmul %73, %8, %cst_13 {dimension_numbers = #tpu.dot_dimension_numbers<[1], [0], [0], [1], [0, 0, 1, 1], [], []>} : vector<8x32xf32>, vector<32x128xf32>, vector<8x128xf32> -> vector<8x128xf32>
    %76 = arith.addf %74, %75 : vector<8x128xf32>
    %77 = arith.negf %76 : vector<8x128xf32>
    %78 = math.exp %77 : vector<8x128xf32>
    %cst_14 = arith.constant 1.000000e+00 : f32
    %79 = vector.broadcast %cst_14 : f32 to vector<8x128xf32>
    %80 = arith.addf %79, %78 : vector<8x128xf32>
    %81 = arith.divf %79, %80 : vector<8x128xf32>
    %82 = math.tanh %76 : vector<8x128xf32>
    %83 = arith.select %14, %82, %81 : vector<8x128xi1>, vector<8x128xf32>
    %84 = vector.extract_strided_slice %83 {offsets = [0, 0], sizes = [8, 32], strides = [1, 1]} : vector<8x128xf32> to vector<8x32xf32>
    %85 = vector.extract_strided_slice %83 {offsets = [0, 32], sizes = [8, 32], strides = [1, 1]} : vector<8x128xf32> to vector<8x32xf32>
    %86 = vector.extract_strided_slice %83 {offsets = [0, 64], sizes = [8, 32], strides = [1, 1]} : vector<8x128xf32> to vector<8x32xf32>
    %87 = vector.extract_strided_slice %83 {offsets = [0, 96], sizes = [8, 32], strides = [1, 1]} : vector<8x128xf32> to vector<8x32xf32>
    %88 = arith.mulf %85, %71 : vector<8x32xf32>
    %89 = arith.mulf %84, %86 : vector<8x32xf32>
    %90 = arith.addf %88, %89 : vector<8x32xf32>
    %91 = math.tanh %90 : vector<8x32xf32>
    %92 = arith.mulf %87, %91 : vector<8x32xf32>
    %93 = vector.extract_strided_slice %7 {offsets = [32, 0], sizes = [8, 128], strides = [1, 1]} : vector<64x128xf32> to vector<8x128xf32>
    %cst_15 = arith.constant dense<0.000000e+00> : vector<8x128xf32>
    %94 = tpu.matmul %92, %8, %cst_15 {dimension_numbers = #tpu.dot_dimension_numbers<[1], [0], [0], [1], [0, 0, 1, 1], [], []>} : vector<8x32xf32>, vector<32x128xf32>, vector<8x128xf32> -> vector<8x128xf32>
    %95 = arith.addf %93, %94 : vector<8x128xf32>
    %96 = arith.negf %95 : vector<8x128xf32>
    %97 = math.exp %96 : vector<8x128xf32>
    %cst_16 = arith.constant 1.000000e+00 : f32
    %98 = vector.broadcast %cst_16 : f32 to vector<8x128xf32>
    %99 = arith.addf %98, %97 : vector<8x128xf32>
    %100 = arith.divf %98, %99 : vector<8x128xf32>
    %101 = math.tanh %95 : vector<8x128xf32>
    %102 = arith.select %14, %101, %100 : vector<8x128xi1>, vector<8x128xf32>
    %103 = vector.extract_strided_slice %102 {offsets = [0, 0], sizes = [8, 32], strides = [1, 1]} : vector<8x128xf32> to vector<8x32xf32>
    %104 = vector.extract_strided_slice %102 {offsets = [0, 32], sizes = [8, 32], strides = [1, 1]} : vector<8x128xf32> to vector<8x32xf32>
    %105 = vector.extract_strided_slice %102 {offsets = [0, 64], sizes = [8, 32], strides = [1, 1]} : vector<8x128xf32> to vector<8x32xf32>
    %106 = vector.extract_strided_slice %102 {offsets = [0, 96], sizes = [8, 32], strides = [1, 1]} : vector<8x128xf32> to vector<8x32xf32>
    %107 = arith.mulf %104, %90 : vector<8x32xf32>
    %108 = arith.mulf %103, %105 : vector<8x32xf32>
    %109 = arith.addf %107, %108 : vector<8x32xf32>
    %110 = math.tanh %109 : vector<8x32xf32>
    %111 = arith.mulf %106, %110 : vector<8x32xf32>
    %112 = vector.extract_strided_slice %7 {offsets = [40, 0], sizes = [8, 128], strides = [1, 1]} : vector<64x128xf32> to vector<8x128xf32>
    %cst_17 = arith.constant dense<0.000000e+00> : vector<8x128xf32>
    %113 = tpu.matmul %111, %8, %cst_17 {dimension_numbers = #tpu.dot_dimension_numbers<[1], [0], [0], [1], [0, 0, 1, 1], [], []>} : vector<8x32xf32>, vector<32x128xf32>, vector<8x128xf32> -> vector<8x128xf32>
    %114 = arith.addf %112, %113 : vector<8x128xf32>
    %115 = arith.negf %114 : vector<8x128xf32>
    %116 = math.exp %115 : vector<8x128xf32>
    %cst_18 = arith.constant 1.000000e+00 : f32
    %117 = vector.broadcast %cst_18 : f32 to vector<8x128xf32>
    %118 = arith.addf %117, %116 : vector<8x128xf32>
    %119 = arith.divf %117, %118 : vector<8x128xf32>
    %120 = math.tanh %114 : vector<8x128xf32>
    %121 = arith.select %14, %120, %119 : vector<8x128xi1>, vector<8x128xf32>
    %122 = vector.extract_strided_slice %121 {offsets = [0, 0], sizes = [8, 32], strides = [1, 1]} : vector<8x128xf32> to vector<8x32xf32>
    %123 = vector.extract_strided_slice %121 {offsets = [0, 32], sizes = [8, 32], strides = [1, 1]} : vector<8x128xf32> to vector<8x32xf32>
    %124 = vector.extract_strided_slice %121 {offsets = [0, 64], sizes = [8, 32], strides = [1, 1]} : vector<8x128xf32> to vector<8x32xf32>
    %125 = vector.extract_strided_slice %121 {offsets = [0, 96], sizes = [8, 32], strides = [1, 1]} : vector<8x128xf32> to vector<8x32xf32>
    %126 = arith.mulf %123, %109 : vector<8x32xf32>
    %127 = arith.mulf %122, %124 : vector<8x32xf32>
    %128 = arith.addf %126, %127 : vector<8x32xf32>
    %129 = math.tanh %128 : vector<8x32xf32>
    %130 = arith.mulf %125, %129 : vector<8x32xf32>
    %131 = vector.extract_strided_slice %7 {offsets = [48, 0], sizes = [8, 128], strides = [1, 1]} : vector<64x128xf32> to vector<8x128xf32>
    %cst_19 = arith.constant dense<0.000000e+00> : vector<8x128xf32>
    %132 = tpu.matmul %130, %8, %cst_19 {dimension_numbers = #tpu.dot_dimension_numbers<[1], [0], [0], [1], [0, 0, 1, 1], [], []>} : vector<8x32xf32>, vector<32x128xf32>, vector<8x128xf32> -> vector<8x128xf32>
    %133 = arith.addf %131, %132 : vector<8x128xf32>
    %134 = arith.negf %133 : vector<8x128xf32>
    %135 = math.exp %134 : vector<8x128xf32>
    %cst_20 = arith.constant 1.000000e+00 : f32
    %136 = vector.broadcast %cst_20 : f32 to vector<8x128xf32>
    %137 = arith.addf %136, %135 : vector<8x128xf32>
    %138 = arith.divf %136, %137 : vector<8x128xf32>
    %139 = math.tanh %133 : vector<8x128xf32>
    %140 = arith.select %14, %139, %138 : vector<8x128xi1>, vector<8x128xf32>
    %141 = vector.extract_strided_slice %140 {offsets = [0, 0], sizes = [8, 32], strides = [1, 1]} : vector<8x128xf32> to vector<8x32xf32>
    %142 = vector.extract_strided_slice %140 {offsets = [0, 32], sizes = [8, 32], strides = [1, 1]} : vector<8x128xf32> to vector<8x32xf32>
    %143 = vector.extract_strided_slice %140 {offsets = [0, 64], sizes = [8, 32], strides = [1, 1]} : vector<8x128xf32> to vector<8x32xf32>
    %144 = vector.extract_strided_slice %140 {offsets = [0, 96], sizes = [8, 32], strides = [1, 1]} : vector<8x128xf32> to vector<8x32xf32>
    %145 = arith.mulf %142, %128 : vector<8x32xf32>
    %146 = arith.mulf %141, %143 : vector<8x32xf32>
    %147 = arith.addf %145, %146 : vector<8x32xf32>
    %148 = math.tanh %147 : vector<8x32xf32>
    %149 = arith.mulf %144, %148 : vector<8x32xf32>
    %150 = vector.extract_strided_slice %7 {offsets = [56, 0], sizes = [8, 128], strides = [1, 1]} : vector<64x128xf32> to vector<8x128xf32>
    %cst_21 = arith.constant dense<0.000000e+00> : vector<8x128xf32>
    %151 = tpu.matmul %149, %8, %cst_21 {dimension_numbers = #tpu.dot_dimension_numbers<[1], [0], [0], [1], [0, 0, 1, 1], [], []>} : vector<8x32xf32>, vector<32x128xf32>, vector<8x128xf32> -> vector<8x128xf32>
    %152 = arith.addf %150, %151 : vector<8x128xf32>
    %153 = arith.negf %152 : vector<8x128xf32>
    %154 = math.exp %153 : vector<8x128xf32>
    %cst_22 = arith.constant 1.000000e+00 : f32
    %155 = vector.broadcast %cst_22 : f32 to vector<8x128xf32>
    %156 = arith.addf %155, %154 : vector<8x128xf32>
    %157 = arith.divf %155, %156 : vector<8x128xf32>
    %158 = math.tanh %152 : vector<8x128xf32>
    %159 = arith.select %14, %158, %157 : vector<8x128xi1>, vector<8x128xf32>
    %160 = vector.extract_strided_slice %159 {offsets = [0, 0], sizes = [8, 32], strides = [1, 1]} : vector<8x128xf32> to vector<8x32xf32>
    %161 = vector.extract_strided_slice %159 {offsets = [0, 32], sizes = [8, 32], strides = [1, 1]} : vector<8x128xf32> to vector<8x32xf32>
    %162 = vector.extract_strided_slice %159 {offsets = [0, 64], sizes = [8, 32], strides = [1, 1]} : vector<8x128xf32> to vector<8x32xf32>
    %163 = vector.extract_strided_slice %159 {offsets = [0, 96], sizes = [8, 32], strides = [1, 1]} : vector<8x128xf32> to vector<8x32xf32>
    %164 = arith.mulf %161, %147 : vector<8x32xf32>
    %165 = arith.mulf %160, %162 : vector<8x32xf32>
    %166 = arith.addf %164, %165 : vector<8x32xf32>
    %167 = math.tanh %166 : vector<8x32xf32>
    %168 = arith.mulf %163, %167 : vector<8x32xf32>
    %c0_23 = arith.constant 0 : index
    %c0_24 = arith.constant 0 : index
    %169 = vector.load %arg1[%c0_23, %c0_24] : memref<8x6xf32, #tpu.memory_space<vmem>>, vector<8x6xf32>
    %c0_25 = arith.constant 0 : index
    %c0_26 = arith.constant 0 : index
    %170 = vector.load %arg4[%c0_25, %c0_26] : memref<6x128xf32, #tpu.memory_space<vmem>>, vector<6x128xf32>
    %cst_27 = arith.constant dense<0.000000e+00> : vector<8x128xf32>
    %171 = tpu.matmul %169, %170, %cst_27 {dimension_numbers = #tpu.dot_dimension_numbers<[1], [0], [0], [1], [0, 0, 1, 1], [], []>} : vector<8x6xf32>, vector<6x128xf32>, vector<8x128xf32> -> vector<8x128xf32>
    %c0_28 = arith.constant 0 : index
    %c0_29 = arith.constant 0 : index
    %172 = vector.load %arg5[%c0_28, %c0_29] : memref<32x128xf32, #tpu.memory_space<vmem>>, vector<32x128xf32>
    %cst_30 = arith.constant dense<0.000000e+00> : vector<8x128xf32>
    %173 = tpu.matmul %168, %172, %cst_30 {dimension_numbers = #tpu.dot_dimension_numbers<[1], [0], [0], [1], [0, 0, 1, 1], [], []>} : vector<8x32xf32>, vector<32x128xf32>, vector<8x128xf32> -> vector<8x128xf32>
    %174 = arith.addf %171, %173 : vector<8x128xf32>
    %c0_31 = arith.constant 0 : index
    %c0_32 = arith.constant 0 : index
    %175 = vector.load %arg6[%c0_31, %c0_32] : memref<1x128xf32, #tpu.memory_space<vmem>>, vector<1x128xf32>
    %176 = vector.broadcast %175 : vector<1x128xf32> to vector<8x128xf32>
    %177 = arith.addf %174, %176 : vector<8x128xf32>
    %cst_33 = arith.constant 0.000000e+00 : f32
    %178 = vector.broadcast %cst_33 : f32 to vector<8x128xf32>
    %179 = arith.maximumf %177, %178 : vector<8x128xf32>
    %c0_34 = arith.constant 0 : index
    %c0_35 = arith.constant 0 : index
    %180 = vector.load %arg7[%c0_34, %c0_35] : memref<128x128xf32, #tpu.memory_space<vmem>>, vector<128x128xf32>
    %cst_36 = arith.constant dense<0.000000e+00> : vector<8x128xf32>
    %181 = tpu.matmul %179, %180, %cst_36 {dimension_numbers = #tpu.dot_dimension_numbers<[1], [0], [0], [1], [0, 0, 1, 1], [], []>} : vector<8x128xf32>, vector<128x128xf32>, vector<8x128xf32> -> vector<8x128xf32>
    %c0_37 = arith.constant 0 : index
    %c0_38 = arith.constant 0 : index
    %182 = vector.load %arg8[%c0_37, %c0_38] : memref<1x128xf32, #tpu.memory_space<vmem>>, vector<1x128xf32>
    %183 = vector.broadcast %182 : vector<1x128xf32> to vector<8x128xf32>
    %184 = arith.addf %181, %183 : vector<8x128xf32>
    %c0_39 = arith.constant 0 : index
    %c0_40 = arith.constant 0 : index
    %185 = vector.load %arg9[%c0_39, %c0_40] : memref<8x128xf32, #tpu.memory_space<vmem>>, vector<8x128xf32>
    tpu.vector_store %arg9[%c0_39, %c0_40], %184 {strides = array<i32>} : memref<8x128xf32, #tpu.memory_space<vmem>>, vector<8x128xf32>,
    return
  }
}

</mosaic_0001>

<llo_original>
// kernel: sku_forward.1
$region0: #{sku_forward.1}
  #allocation0 [shape = 'u32[]', space=smem, size = 0x4, offset = 0x4, fixed_abs, tag = 'smem constant byte address 0x4 - core index']
  #allocation1 [shape = 'u32[144,128]{1,0:T(1,128)}', space=vmem, size = 0x12000, scoped, tag = 'internal scratch']
  %s0 = inlined_call_operand.vmem [shape: s32[64,1], index: 0, kind: input, shape index: {}]
  %s1 = inlined_call_operand.vmem [shape: f32[8,6], index: 1, kind: input, shape index: {}]
  %s2 = inlined_call_operand.hbm [shape: f32[56,128], index: 2, kind: input, shape index: {}]
  %s3 = inlined_call_operand.hbm [shape: f32[32,128], index: 3, kind: input, shape index: {}]
  %s4 = inlined_call_operand.hbm [shape: f32[6,128], index: 4, kind: input, shape index: {}]
  %s5 = inlined_call_operand.hbm [shape: f32[32,128], index: 5, kind: input, shape index: {}]
  %s6 = inlined_call_operand.vmem [shape: f32[1,128], index: 6, kind: input, shape index: {}]
  %s7 = inlined_call_operand.vmem [shape: f32[128,128], index: 7, kind: input, shape index: {}]
  %s8 = inlined_call_operand.vmem [shape: f32[1,128], index: 8, kind: input, shape index: {}]
  %s9 = inlined_call_operand.vmem [shape: f32[8,128], index: 9, kind: output, shape index: {}]
  %s10 = sld [smem:[#allocation0]]
  $region62: #{sku_forward.1} parent=0
    _
  %s12 = ssub.s32 1, %s10
  %s13 = scalar_select 0, %s12, %s10
  $region1: #{sku_forward.1} parent=0
    #allocation2 [shape = 'u8[28672]{0}', space=vmem, size = 0x7000, scoped, tag = 'input window, operand 2, single buffered']
    #allocation3 [shape = 's32[1]{0}', space=sflag, size = 0x4, scoped, tag = 'scoped memory for sku_forward.1']
    #allocation4 [shape = 'u8[16384]{0}', space=vmem, size = 0x4000, scoped, tag = 'input window, operand 3, single buffered']
    #allocation5 [shape = 's32[1]{0}', space=sflag, size = 0x4, scoped, tag = 'scoped memory for sku_forward.1']
    #allocation6 [shape = 'u8[4096]{0}', space=vmem, size = 0x1000, scoped, tag = 'input window, operand 4, single buffered']
    #allocation7 [shape = 'u8[16384]{0}', space=vmem, size = 0x4000, scoped, tag = 'input window, operand 5, single buffered']
    #allocation8 [shape = 's32[1]{0}', space=sflag, size = 0x4, scoped, tag = 'scoped memory for sku_forward.1']
    %14 = vsyncpa [#allocation3], 0
    %15 = vsyncpa [#allocation5], 0
    %16 = vsyncpa [#allocation8], 0
    // Predicated region
    $region2: #{sku_forward.1} parent=1 // pred_check
      _
    $region3: #{sku_forward.1} parent=1 // pred_check_branch
      %18 = sbr.rel (0) target = $region5
    $region4: #{sku_forward.1} parent=1 // pred_region
      _
    $region5: #{sku_forward.1} parent=1 // pred_fallthru
      _
    // Predicated region
    $region6: #{sku_forward.1} parent=1 // pred_check
      _
    $region7: #{sku_forward.1} parent=1 // pred_check_branch
      %20 = sbr.rel (0) target = $region9
    $region8: #{sku_forward.1} parent=1 // pred_region
      _
    $region9: #{sku_forward.1} parent=1 // pred_fallthru
      _
    // Predicated region
    $region10: #{sku_forward.1} parent=1 // pred_check
      _
    $region11: #{sku_forward.1} parent=1 // pred_check_branch
      %22 = sbr.rel (0) target = $region13
    $region12: #{sku_forward.1} parent=1 // pred_region
      %s24 = ssub.s32 896, 896
      %25 = vsyncadd [#allocation3], %s24
      %s26 = sshll.u32 [#allocation2], 4
      %s27 = int_to_ptr.vmem [resolvable:$true] %s26
      %32 = dma.hbm_to_vmem [thread:$0]  %s2, 896, %s27, [#allocation3], 128, 128, 8
    $region13: #{sku_forward.1} parent=1 // pred_fallthru
      _
    // Predicated region
    $region14: #{sku_forward.1} parent=1 // pred_check
      _
    $region15: #{sku_forward.1} parent=1 // pred_check_branch
      %34 = sbr.rel (0) target = $region17
    $region16: #{sku_forward.1} parent=1 // pred_region
      %s36 = ssub.s32 512, 512
      %37 = vsyncadd [#allocation5], %s36
      %s38 = sshll.u32 [#allocation4], 4
      %s39 = int_to_ptr.vmem [resolvable:$true] %s38
      %44 = dma.hbm_to_vmem [thread:$0]  %s3, 512, %s39, [#allocation5], 128, 128, 8
    $region17: #{sku_forward.1} parent=1 // pred_fallthru
      _
    // Predicated region
    $region18: #{sku_forward.1} parent=1 // pred_check
      _
    $region19: #{sku_forward.1} parent=1 // pred_check_branch
      %46 = sbr.rel (0) target = $region21
    $region20: #{sku_forward.1} parent=1 // pred_region
      %s48 = ssub.s32 128, 128
      %49 = vsyncadd [#allocation5], %s48
      %s51 = sshll.u32 [#allocation6], 4
      %s52 = int_to_ptr.vmem [resolvable:$true] %s51
      %54 = dma.hbm_to_vmem [thread:$0]  %s4, 128, %s52, [#allocation5]
    $region21: #{sku_forward.1} parent=1 // pred_fallthru
      _
    // Predicated region
    $region22: #{sku_forward.1} parent=1 // pred_check
      _
    $region23: #{sku_forward.1} parent=1 // pred_check_branch
      %56 = sbr.rel (0) target = $region25
    $region24: #{sku_forward.1} parent=1 // pred_region
      %s58 = ssub.s32 512, 512
      %59 = vsyncadd [#allocation8], %s58
      %s60 = sshll.u32 [#allocation7], 4
      %s61 = int_to_ptr.vmem [resolvable:$true] %s60
      %66 = dma.hbm_to_vmem [thread:$0]  %s5, 512, %s61, [#allocation8], 128, 128, 8
    $region25: #{sku_forward.1} parent=1 // pred_fallthru
      _
    // Predicated region
    $region26: #{sku_forward.1} parent=1 // pred_check
      _
    $region27: #{sku_forward.1} parent=1 // pred_check_branch
      %68 = sbr.rel (0) target = $region29
    $region28: #{sku_forward.1} parent=1 // pred_region
      _
    $region29: #{sku_forward.1} parent=1 // pred_fallthru
      _
    // Predicated region
    $region30: #{sku_forward.1} parent=1 // pred_check
      _
    $region31: #{sku_forward.1} parent=1 // pred_check_branch
      %70 = sbr.rel (0) target = $region33
    $region32: #{sku_forward.1} parent=1 // pred_region
      _
    $region33: #{sku_forward.1} parent=1 // pred_fallthru
      _
    // Predicated region
    $region34: #{sku_forward.1} parent=1 // pred_check
      _
    $region35: #{sku_forward.1} parent=1 // pred_check_branch
      %72 = sbr.rel (0) target = $region37
    $region36: #{sku_forward.1} parent=1 // pred_region
      _
    $region37: #{sku_forward.1} parent=1 // pred_fallthru
      _
    // Predicated region
    $region38: #{sku_forward.1} parent=1 // pred_check
      _
    $region39: #{sku_forward.1} parent=1 // pred_check_branch
      %74 = sbr.rel (0) target = $region41
    $region40: #{sku_forward.1} parent=1 // pred_region
      %75 = dma.done [#allocation3], 896
    $region41: #{sku_forward.1} parent=1 // pred_fallthru
      _
    // Predicated region
    $region42: #{sku_forward.1} parent=1 // pred_check
      _
    $region43: #{sku_forward.1} parent=1 // pred_check_branch
      %77 = sbr.rel (0) target = $region45
    $region44: #{sku_forward.1} parent=1 // pred_region
      %78 = dma.done [#allocation5], 512
    $region45: #{sku_forward.1} parent=1 // pred_fallthru
      _
    // Predicated region
    $region46: #{sku_forward.1} parent=1 // pred_check
      _
    $region47: #{sku_forward.1} parent=1 // pred_check_branch
      %80 = sbr.rel (0) target = $region49
    $region48: #{sku_forward.1} parent=1 // pred_region
      %81 = dma.done [#allocation5], 128
    $region49: #{sku_forward.1} parent=1 // pred_fallthru
      _
    // Predicated region
    $region50: #{sku_forward.1} parent=1 // pred_check
      _
    $region51: #{sku_forward.1} parent=1 // pred_check_branch
      %83 = sbr.rel (0) target = $region53
    $region52: #{sku_forward.1} parent=1 // pred_region
      %84 = dma.done [#allocation8], 512
    $region53: #{sku_forward.1} parent=1 // pred_fallthru
      _
    %v85 = vld [vmem:[%s0] sm:$0xff]
    %v86 = vld [vmem:[%s0 + $0x8] sm:$0xff]
    %v87 = vld [vmem:[%s0 + $0x10] sm:$0xff]
    %v88 = vld [vmem:[%s0 + $0x18] sm:$0xff]
    %v89 = vld [vmem:[%s0 + $0x20] sm:$0xff]
    %v90 = vld [vmem:[%s0 + $0x28] sm:$0xff]
    %v91 = vld [vmem:[%s0 + $0x30] sm:$0xff]
    %v92 = vld [vmem:[%s0 + $0x38] sm:$0xff]
    %v93 = vlaneseq
    %v94 = vand.u32 %v93, 127
    %95 = vset.pattern.permute.xlu0 0
    %96 = vperm.xlu0 %95, %v85
    %v97 = vpop.permute.xlu0 %96
    %98 = vset.pattern.permute.xlu0 0
    %99 = vperm.xlu0 %98, %v86
    %v100 = vpop.permute.xlu0 %99
    %101 = vset.pattern.permute.xlu0 0
    %102 = vperm.xlu0 %101, %v87
    %v103 = vpop.permute.xlu0 %102
    %104 = vset.pattern.permute.xlu0 0
    %105 = vperm.xlu0 %104, %v88
    %v106 = vpop.permute.xlu0 %105
    %107 = vset.pattern.permute.xlu0 0
    %108 = vperm.xlu0 %107, %v89
    %v109 = vpop.permute.xlu0 %108
    %110 = vset.pattern.permute.xlu0 0
    %111 = vperm.xlu0 %110, %v90
    %v112 = vpop.permute.xlu0 %111
    %113 = vset.pattern.permute.xlu0 0
    %114 = vperm.xlu0 %113, %v91
    %v115 = vpop.permute.xlu0 %114
    %116 = vset.pattern.permute.xlu0 0
    %117 = vperm.xlu0 %116, %v92
    %v118 = vpop.permute.xlu0 %117
    %vm119 = vcmp.eq.s32.totalorder %v94, %v97
    %vm120 = vcmp.eq.s32.totalorder %v94, %v100
    %vm121 = vcmp.eq.s32.totalorder %v94, %v103
    %vm122 = vcmp.eq.s32.totalorder %v94, %v106
    %vm123 = vcmp.eq.s32.totalorder %v94, %v109
    %vm124 = vcmp.eq.s32.totalorder %v94, %v112
    %vm125 = vcmp.eq.s32.totalorder %v94, %v115
    %vm126 = vcmp.eq.s32.totalorder %v94, %v118
    %v127 = vsel %vm119, 1, 0
    %v128 = vsel %vm120, 1, 0
    %v129 = vsel %vm121, 1, 0
    %v130 = vsel %vm122, 1, 0
    %v131 = vsel %vm123, 1, 0
    %v132 = vsel %vm124, 1, 0
    %v133 = vsel %vm125, 1, 0
    %v134 = vsel %vm126, 1, 0
    %v135 = vcvt.s32.f32 %v127
    %v136 = vcvt.s32.f32 %v128
    %v137 = vcvt.s32.f32 %v129
    %v138 = vcvt.s32.f32 %v130
    %v139 = vcvt.s32.f32 %v131
    %v140 = vcvt.s32.f32 %v132
    %v141 = vcvt.s32.f32 %v133
    %v142 = vcvt.s32.f32 %v134
    %v143 = vld [vmem:[#allocation2] sm:$0xff]
    %v144 = vld [vmem:[#allocation2 + $0x8] sm:$0xff]
    %v145 = vld [vmem:[#allocation2 + $0x10] sm:$0xff]
    %v146 = vld [vmem:[#allocation2 + $0x18] sm:$0xff]
    %v147 = vld [vmem:[#allocation2 + $0x20] sm:$0xff]
    %v148 = vld [vmem:[#allocation2 + $0x28] sm:$0xff]
    %v149 = vld [vmem:[#allocation2 + $0x30] sm:$0xff]
    %vm150 = vcmask 457728
    %v152 = vsel %vm150, %v135, 0
    %v155 = vsel %vm150, %v136, 0
    %v158 = vsel %vm150, %v137, 0
    %v161 = vsel %vm150, %v138, 0
    %v164 = vsel %vm150, %v139, 0
    %v167 = vsel %vm150, %v140, 0
    %v170 = vsel %vm150, %v141, 0
    %v173 = vsel %vm150, %v142, 0
    %175 = vmatprep.subr.mxu0 0.0
    %176 = vmatpush1.msra.mxu0 %v143
    %177 = vmatprep.subr.mxu0 0.0
    %178 = vmatpush1.msra.mxu0 %v144
    %179 = vmatprep.subr.mxu0 0.0
    %180 = vmatpush1.msra.mxu0 %v145
    %181 = vmatprep.subr.mxu0 0.0
    %182 = vmatpush1.msra.mxu0 %v146
    %183 = vmatprep.subr.mxu0 0.0
    %184 = vmatpush1.msra.mxu0 %v147
    %185 = vmatprep.subr.mxu0 0.0
    %186 = vmatpush1.msra.mxu0 %v148
    %187 = vmatprep.subr.mxu0 0.0
    %188 = vmatpush1.msra.mxu0 %v149
    %189 = vmatprep.subr.mxu0 0.0
    %190 = vmatpush1.msra.mxu0 0.0
    %191 = vmatprep.subr.mxu0 0.0
    %192 = vmatpush1.msra.mxu0 0.0
    %193 = vmatprep.subr.mxu0 0.0
    %194 = vmatpush1.msra.mxu0 0.0
    %195 = vmatprep.subr.mxu0 0.0
    %196 = vmatpush1.msra.mxu0 0.0
    %197 = vmatprep.subr.mxu0 0.0
    %198 = vmatpush1.msra.mxu0 0.0
    %199 = vmatprep.subr.mxu0 0.0
    %200 = vmatpush1.msra.mxu0 0.0
    %201 = vmatprep.subr.mxu0 0.0
    %202 = vmatpush1.msra.mxu0 0.0
    %203 = vmatprep.subr.mxu0 0.0
    %204 = vmatpush1.msra.mxu0 0.0
    %205 = vmatprep.subr.mxu0 0.0
    %206 = vmatpush1.msra.mxu0 0.0
    %207 = vmatprep.subr.mxu0 0.0
    %208 = vmatpush1.msra.mxu0 0.0
    %209 = vmatprep.subr.mxu0 0.0
    %210 = vmatpush1.msra.mxu0 0.0
    %211 = vmatprep.subr.mxu0 0.0
    %212 = vmatpush1.msra.mxu0 0.0
    %213 = vmatprep.subr.mxu0 0.0
    %214 = vmatpush1.msra.mxu0 0.0
    %215 = vmatprep.subr.mxu0 0.0
    %216 = vmatpush1.msra.mxu0 0.0
    %217 = vmatprep.subr.mxu0 0.0
    %218 = vmatpush1.msra.mxu0 0.0
    %219 = vmatprep.subr.mxu0 0.0
    %220 = vmatpush1.msra.mxu0 0.0
    %221 = vmatprep.subr.mxu0 0.0
    %222 = vmatpush1.msra.mxu0 0.0
    %223 = vmatprep.subr.mxu0 0.0
    %224 = vmatpush1.msra.mxu0 0.0
    %225 = vmatprep.subr.mxu0 0.0
    %226 = vmatpush1.msra.mxu0 0.0
    %227 = vmatprep.subr.mxu0 0.0
    %228 = vmatpush1.msra.mxu0 0.0
    %229 = vmatprep.subr.mxu0 0.0
    %230 = vmatpush1.msra.mxu0 0.0
    %231 = vmatprep.subr.mxu0 0.0
    %232 = vmatpush1.msra.mxu0 0.0
    %233 = vmatprep.subr.mxu0 0.0
    %234 = vmatpush1.msra.mxu0 0.0
    %235 = vmatprep.subr.mxu0 0.0
    %236 = vmatpush1.msra.mxu0 0.0
    %237 = vmatprep.subr.mxu0 0.0
    %238 = vmatpush1.msra.mxu0 0.0
    %239 = vmatprep.mubr.f32.mxu0 0.0
    %240 = vmatmul.mubr.f32.gmra.mrb[0].mxu0 %v152
    %v241 = vpop.f32.mrb[0].mxu0
    %v242 = vadd.f32 0.0, %v241
    %v243 = vpop.f32.mrb[0].mxu0
    %244 = vmatprep.mubr.f32.mxu0 0.0
    %245 = vmatmul.mubr.f32.gmra.mrb[0].mxu0 %v155
    %v246 = vpop.f32.mrb[0].mxu0
    %v247 = vadd.f32 0.0, %v246
    %v248 = vpop.f32.mrb[0].mxu0
    %249 = vmatprep.mubr.f32.mxu0 0.0
    %250 = vmatmul.mubr.f32.gmra.mrb[0].mxu0 %v158
    %v251 = vpop.f32.mrb[0].mxu0
    %v252 = vadd.f32 0.0, %v251
    %v253 = vpop.f32.mrb[0].mxu0
    %254 = vmatprep.mubr.f32.mxu0 0.0
    %255 = vmatmul.mubr.f32.gmra.mrb[0].mxu0 %v161
    %v256 = vpop.f32.mrb[0].mxu0
    %v257 = vadd.f32 0.0, %v256
    %v258 = vpop.f32.mrb[0].mxu0
    %259 = vmatprep.mubr.f32.mxu0 0.0
    %260 = vmatmul.mubr.f32.gmra.mrb[0].mxu0 %v164
    %v261 = vpop.f32.mrb[0].mxu0
    %v262 = vadd.f32 0.0, %v261
    %v263 = vpop.f32.mrb[0].mxu0
    %264 = vmatprep.mubr.f32.mxu0 0.0
    %265 = vmatmul.mubr.f32.gmra.mrb[0].mxu0 %v167
    %v266 = vpop.f32.mrb[0].mxu0
    %v267 = vadd.f32 0.0, %v266
    %v268 = vpop.f32.mrb[0].mxu0
    %269 = vmatprep.mubr.f32.mxu0 0.0
    %270 = vmatmul.mubr.f32.gmra.mrb[0].mxu0 %v170
    %v271 = vpop.f32.mrb[0].mxu0
    %v272 = vadd.f32 0.0, %v271
    %v273 = vpop.f32.mrb[0].mxu0
    %274 = vmatprep.mubr.f32.mxu0 0.0
    %275 = vmatmul.mubr.f32.gmra.mrb[0].mxu0 %v173
    %v276 = vpop.f32.mrb[0].mxu0
    %v277 = vadd.f32 0.0, %v276
    %v278 = vpop.f32.mrb[0].mxu0
    %279 = vdwg.mxu0
    %v280 = vld [vmem:[#allocation4] sm:$0xff]
    %v281 = vld [vmem:[#allocation4 + $0x8] sm:$0xff]
    %v282 = vld [vmem:[#allocation4 + $0x10] sm:$0xff]
    %v283 = vld [vmem:[#allocation4 + $0x18] sm:$0xff]
    %vm284 = vcmp.ge.s32.totalorder %v94, 64
    %vm285 = vcmp.lt.s32.totalorder %v94, 96
    %vm286 = vmand %vm284, %vm285
    %vm287 = vcmask 261120
    %v289 = vsel %vm287, 0.0, 0
    %291 = vmatprep.subr.mxu0 0.0
    %292 = vmatpush1.msra.mxu0 %v280
    %293 = vmatprep.subr.mxu0 0.0
    %294 = vmatpush1.msra.mxu0 %v281
    %295 = vmatprep.subr.mxu0 0.0
    %296 = vmatpush1.msra.mxu0 %v282
    %297 = vmatprep.subr.mxu0 0.0
    %298 = vmatpush1.msra.mxu0 %v283
    %299 = vmatprep.subr.mxu0 0.0
    %300 = vmatpush1.msra.mxu0 0.0
    %301 = vmatprep.subr.mxu0 0.0
    %302 = vmatpush1.msra.mxu0 0.0
    %303 = vmatprep.subr.mxu0 0.0
    %304 = vmatpush1.msra.mxu0 0.0
    %305 = vmatprep.subr.mxu0 0.0
    %306 = vmatpush1.msra.mxu0 0.0
    %307 = vmatprep.subr.mxu0 0.0
    %308 = vmatpush1.msra.mxu0 0.0
    %309 = vmatprep.subr.mxu0 0.0
    %310 = vmatpush1.msra.mxu0 0.0
    %311 = vmatprep.subr.mxu0 0.0
    %312 = vmatpush1.msra.mxu0 0.0
    %313 = vmatprep.subr.mxu0 0.0
    %314 = vmatpush1.msra.mxu0 0.0
    %315 = vmatprep.subr.mxu0 0.0
    %316 = vmatpush1.msra.mxu0 0.0
    %317 = vmatprep.subr.mxu0 0.0
    %318 = vmatpush1.msra.mxu0 0.0
    %319 = vmatprep.subr.mxu0 0.0
    %320 = vmatpush1.msra.mxu0 0.0
    %321 = vmatprep.subr.mxu0 0.0
    %322 = vmatpush1.msra.mxu0 0.0
    %323 = vmatprep.subr.mxu0 0.0
    %324 = vmatpush1.msra.mxu0 0.0
    %325 = vmatprep.subr.mxu0 0.0
    %326 = vmatpush1.msra.mxu0 0.0
    %327 = vmatprep.subr.mxu0 0.0
    %328 = vmatpush1.msra.mxu0 0.0
    %329 = vmatprep.subr.mxu0 0.0
    %330 = vmatpush1.msra.mxu0 0.0
    %331 = vmatprep.subr.mxu0 0.0
    %332 = vmatpush1.msra.mxu0 0.0
    %333 = vmatprep.subr.mxu0 0.0
    %334 = vmatpush1.msra.mxu0 0.0
    %335 = vmatprep.subr.mxu0 0.0
    %336 = vmatpush1.msra.mxu0 0.0
    %337 = vmatprep.subr.mxu0 0.0
    %338 = vmatpush1.msra.mxu0 0.0
    %339 = vmatprep.subr.mxu0 0.0
    %340 = vmatpush1.msra.mxu0 0.0
    %341 = vmatprep.subr.mxu0 0.0
    %342 = vmatpush1.msra.mxu0 0.0
    %343 = vmatprep.subr.mxu0 0.0
    %344 = vmatpush1.msra.mxu0 0.0
    %345 = vmatprep.subr.mxu0 0.0
    %346 = vmatpush1.msra.mxu0 0.0
    %347 = vmatprep.subr.mxu0 0.0
    %348 = vmatpush1.msra.mxu0 0.0
    %349 = vmatprep.subr.mxu0 0.0
    %350 = vmatpush1.msra.mxu0 0.0
    %351 = vmatprep.subr.mxu0 0.0
    %352 = vmatpush1.msra.mxu0 0.0
    %353 = vmatprep.subr.mxu0 0.0
    %354 = vmatpush1.msra.mxu0 0.0
    %355 = vmatprep.mubr.f32.mxu0 0.0
    %356 = vmatmul.mubr.f32.gmra.mrb[0].mxu0 %v289
    %v357 = vpop.f32.mrb[0].mxu0
    %v358 = vadd.f32 0.0, %v357
    %v359 = vpop.f32.mrb[0].mxu0
    %360 = vdwg.mxu0
    %v361 = vadd.f32 %v242, %v358
    %v362 = vxor.u32 %v361, 2147483648
    %v363 = vmul.f32 %v362, 1.442695
    %v364 = vpow.pop %v363
    %v365 = vadd.f32 %v364, 1.0
    %v366 = vrcp.pop %v365
    %v367 = vmul.f32 1.0, %v366
    %v368 = vtanh.pop %v361
    %v369 = vsel %vm286, %v368, %v367
    %v370 = vmul.f32 %v369, 0.0
    %372 = vrot.lane.b32.xlu0 %v369, 64
    %v373 = vpop.permute.xlu0 %372
    %v375 = vmul.f32 %v369, %v373
    %377 = vrot.lane.b32.xlu0 %v375, 32
    %v378 = vpop.permute.xlu0 %377
    %v380 = vadd.f32 %v370, %v378
    %v381 = vtanh.pop %v380
    %383 = vrot.lane.b32.xlu0 %v381, 64
    %v384 = vpop.permute.xlu0 %383
    %v386 = vmul.f32 %v369, %v384
    %388 = vrot.lane.b32.xlu0 %v386, 32
    %v389 = vpop.permute.xlu0 %388
    %v390 = vsel %vm287, %v389, 0
    %392 = vmatprep.subr.mxu0 0.0
    %393 = vmatpush1.msra.mxu0 %v280
    %394 = vmatprep.subr.mxu0 0.0
    %395 = vmatpush1.msra.mxu0 %v281
    %396 = vmatprep.subr.mxu0 0.0
    %397 = vmatpush1.msra.mxu0 %v282
    %398 = vmatprep.subr.mxu0 0.0
    %399 = vmatpush1.msra.mxu0 %v283
    %400 = vmatprep.subr.mxu0 0.0
    %401 = vmatpush1.msra.mxu0 0.0
    %402 = vmatprep.subr.mxu0 0.0
    %403 = vmatpush1.msra.mxu0 0.0
    %404 = vmatprep.subr.mxu0 0.0
    %405 = vmatpush1.msra.mxu0 0.0
    %406 = vmatprep.subr.mxu0 0.0
    %407 = vmatpush1.msra.mxu0 0.0
    %408 = vmatprep.subr.mxu0 0.0
    %409 = vmatpush1.msra.mxu0 0.0
    %410 = vmatprep.subr.mxu0 0.0
    %411 = vmatpush1.msra.mxu0 0.0
    %412 = vmatprep.subr.mxu0 0.0
    %413 = vmatpush1.msra.mxu0 0.0
    %414 = vmatprep.subr.mxu0 0.0
    %415 = vmatpush1.msra.mxu0 0.0
    %416 = vmatprep.subr.mxu0 0.0
    %417 = vmatpush1.msra.mxu0 0.0
    %418 = vmatprep.subr.mxu0 0.0
    %419 = vmatpush1.msra.mxu0 0.0
    %420 = vmatprep.subr.mxu0 0.0
    %421 = vmatpush1.msra.mxu0 0.0
    %422 = vmatprep.subr.mxu0 0.0
    %423 = vmatpush1.msra.mxu0 0.0
    %424 = vmatprep.subr.mxu0 0.0
    %425 = vmatpush1.msra.mxu0 0.0
    %426 = vmatprep.subr.mxu0 0.0
    %427 = vmatpush1.msra.mxu0 0.0
    %428 = vmatprep.subr.mxu0 0.0
    %429 = vmatpush1.msra.mxu0 0.0
    %430 = vmatprep.subr.mxu0 0.0
    %431 = vmatpush1.msra.mxu0 0.0
    %432 = vmatprep.subr.mxu0 0.0
    %433 = vmatpush1.msra.mxu0 0.0
    %434 = vmatprep.subr.mxu0 0.0
    %435 = vmatpush1.msra.mxu0 0.0
    %436 = vmatprep.subr.mxu0 0.0
    %437 = vmatpush1.msra.mxu0 0.0
    %438 = vmatprep.subr.mxu0 0.0
    %439 = vmatpush1.msra.mxu0 0.0
    %440 = vmatprep.subr.mxu0 0.0
    %441 = vmatpush1.msra.mxu0 0.0
    %442 = vmatprep.subr.mxu0 0.0
    %443 = vmatpush1.msra.mxu0 0.0
    %444 = vmatprep.subr.mxu0 0.0
    %445 = vmatpush1.msra.mxu0 0.0
    %446 = vmatprep.subr.mxu0 0.0
    %447 = vmatpush1.msra.mxu0 0.0
    %448 = vmatprep.subr.mxu0 0.0
    %449 = vmatpush1.msra.mxu0 0.0
    %450 = vmatprep.subr.mxu0 0.0
    %451 = vmatpush1.msra.mxu0 0.0
    %452 = vmatprep.subr.mxu0 0.0
    %453 = vmatpush1.msra.mxu0 0.0
    %454 = vmatprep.subr.mxu0 0.0
    %455 = vmatpush1.msra.mxu0 0.0
    %456 = vmatprep.mubr.f32.mxu0 0.0
    %457 = vmatmul.mubr.f32.gmra.mrb[0].mxu0 %v390
    %v458 = vpop.f32.mrb[0].mxu0
    %v459 = vadd.f32 0.0, %v458
    %v460 = vpop.f32.mrb[0].mxu0
    %461 = vdwg.mxu0
    %v462 = vadd.f32 %v247, %v459
    %v463 = vxor.u32 %v462, 2147483648
    %v464 = vmul.f32 %v463, 1.442695
    %v465 = vpow.pop %v464
    %v466 = vadd.f32 %v465, 1.0
    %v467 = vrcp.pop %v466
    %v468 = vmul.f32 1.0, %v467
    %v469 = vtanh.pop %v462
    %v470 = vsel %vm286, %v469, %v468
    %v471 = vmul.f32 %v470, %v380
    %473 = vrot.lane.b32.xlu0 %v470, 64
    %v474 = vpop.permute.xlu0 %473
    %v476 = vmul.f32 %v470, %v474
    %478 = vrot.lane.b32.xlu0 %v476, 32
    %v479 = vpop.permute.xlu0 %478
    %v481 = vadd.f32 %v471, %v479
    %v482 = vtanh.pop %v481
    %484 = vrot.lane.b32.xlu0 %v482, 64
    %v485 = vpop.permute.xlu0 %484
    %v487 = vmul.f32 %v470, %v485
    %489 = vrot.lane.b32.xlu0 %v487, 32
    %v490 = vpop.permute.xlu0 %489
    %v491 = vsel %vm287, %v490, 0
    %493 = vmatprep.subr.mxu0 0.0
    %494 = vmatpush1.msra.mxu0 %v280
    %495 = vmatprep.subr.mxu0 0.0
    %496 = vmatpush1.msra.mxu0 %v281
    %497 = vmatprep.subr.mxu0 0.0
    %498 = vmatpush1.msra.mxu0 %v282
    %499 = vmatprep.subr.mxu0 0.0
    %500 = vmatpush1.msra.mxu0 %v283
    %501 = vmatprep.subr.mxu0 0.0
    %502 = vmatpush1.msra.mxu0 0.0
    %503 = vmatprep.subr.mxu0 0.0
    %504 = vmatpush1.msra.mxu0 0.0
    %505 = vmatprep.subr.mxu0 0.0
    %506 = vmatpush1.msra.mxu0 0.0
    %507 = vmatprep.subr.mxu0 0.0
    %508 = vmatpush1.msra.mxu0 0.0
    %509 = vmatprep.subr.mxu0 0.0
    %510 = vmatpush1.msra.mxu0 0.0
    %511 = vmatprep.subr.mxu0 0.0
    %512 = vmatpush1.msra.mxu0 0.0
    %513 = vmatprep.subr.mxu0 0.0
    %514 = vmatpush1.msra.mxu0 0.0
    %515 = vmatprep.subr.mxu0 0.0
    %516 = vmatpush1.msra.mxu0 0.0
    %517 = vmatprep.subr.mxu0 0.0
    %518 = vmatpush1.msra.mxu0 0.0
    %519 = vmatprep.subr.mxu0 0.0
    %520 = vmatpush1.msra.mxu0 0.0
    %521 = vmatprep.subr.mxu0 0.0
    %522 = vmatpush1.msra.mxu0 0.0
    %523 = vmatprep.subr.mxu0 0.0
    %524 = vmatpush1.msra.mxu0 0.0
    %525 = vmatprep.subr.mxu0 0.0
    %526 = vmatpush1.msra.mxu0 0.0
    %527 = vmatprep.subr.mxu0 0.0
    %528 = vmatpush1.msra.mxu0 0.0
    %529 = vmatprep.subr.mxu0 0.0
    %530 = vmatpush1.msra.mxu0 0.0
    %531 = vmatprep.subr.mxu0 0.0
    %532 = vmatpush1.msra.mxu0 0.0
    %533 = vmatprep.subr.mxu0 0.0
    %534 = vmatpush1.msra.mxu0 0.0
    %535 = vmatprep.subr.mxu0 0.0
    %536 = vmatpush1.msra.mxu0 0.0
    %537 = vmatprep.subr.mxu0 0.0
    %538 = vmatpush1.msra.mxu0 0.0
    %539 = vmatprep.subr.mxu0 0.0
    %540 = vmatpush1.msra.mxu0 0.0
    %541 = vmatprep.subr.mxu0 0.0
    %542 = vmatpush1.msra.mxu0 0.0
    %543 = vmatprep.subr.mxu0 0.0
    %544 = vmatpush1.msra.mxu0 0.0
    %545 = vmatprep.subr.mxu0 0.0
    %546 = vmatpush1.msra.mxu0 0.0
    %547 = vmatprep.subr.mxu0 0.0
    %548 = vmatpush1.msra.mxu0 0.0
    %549 = vmatprep.subr.mxu0 0.0
    %550 = vmatpush1.msra.mxu0 0.0
    %551 = vmatprep.subr.mxu0 0.0
    %552 = vmatpush1.msra.mxu0 0.0
    %553 = vmatprep.subr.mxu0 0.0
    %554 = vmatpush1.msra.mxu0 0.0
    %555 = vmatprep.subr.mxu0 0.0
    %556 = vmatpush1.msra.mxu0 0.0
    %557 = vmatprep.mubr.f32.mxu0 0.0
    %558 = vmatmul.mubr.f32.gmra.mrb[0].mxu0 %v491
    %v559 = vpop.f32.mrb[0].mxu0
    %v560 = vadd.f32 0.0, %v559
    %v561 = vpop.f32.mrb[0].mxu0
    %562 = vdwg.mxu0
    %v563 = vadd.f32 %v252, %v560
    %v564 = vxor.u32 %v563, 2147483648
    %v565 = vmul.f32 %v564, 1.442695
    %v566 = vpow.pop %v565
    %v567 = vadd.f32 %v566, 1.0
    %v568 = vrcp.pop %v567
    %v569 = vmul.f32 1.0, %v568
    %v570 = vtanh.pop %v563
    %v571 = vsel %vm286, %v570, %v569
    %v572 = vmul.f32 %v571, %v481
    %574 = vrot.lane.b32.xlu0 %v571, 64
    %v575 = vpop.permute.xlu0 %574
    %v577 = vmul.f32 %v571, %v575
    %579 = vrot.lane.b32.xlu0 %v577, 32
    %v580 = vpop.permute.xlu0 %579
    %v582 = vadd.f32 %v572, %v580
    %v583 = vtanh.pop %v582
    %585 = vrot.lane.b32.xlu0 %v583, 64
    %v586 = vpop.permute.xlu0 %585
    %v588 = vmul.f32 %v571, %v586
    %590 = vrot.lane.b32.xlu0 %v588, 32
    %v591 = vpop.permute.xlu0 %590
    %v592 = vsel %vm287, %v591, 0
    %594 = vmatprep.subr.mxu0 0.0
    %595 = vmatpush1.msra.mxu0 %v280
    %596 = vmatprep.subr.mxu0 0.0
    %597 = vmatpush1.msra.mxu0 %v281
    %598 = vmatprep.subr.mxu0 0.0
    %599 = vmatpush1.msra.mxu0 %v282
    %600 = vmatprep.subr.mxu0 0.0
    %601 = vmatpush1.msra.mxu0 %v283
    %602 = vmatprep.subr.mxu0 0.0
    %603 = vmatpush1.msra.mxu0 0.0
    %604 = vmatprep.subr.mxu0 0.0
    %605 = vmatpush1.msra.mxu0 0.0
    %606 = vmatprep.subr.mxu0 0.0
    %607 = vmatpush1.msra.mxu0 0.0
    %608 = vmatprep.subr.mxu0 0.0
    %609 = vmatpush1.msra.mxu0 0.0
    %610 = vmatprep.subr.mxu0 0.0
    %611 = vmatpush1.msra.mxu0 0.0
    %612 = vmatprep.subr.mxu0 0.0
    %613 = vmatpush1.msra.mxu0 0.0
    %614 = vmatprep.subr.mxu0 0.0
    %615 = vmatpush1.msra.mxu0 0.0
    %616 = vmatprep.subr.mxu0 0.0
    %617 = vmatpush1.msra.mxu0 0.0
    %618 = vmatprep.subr.mxu0 0.0
    %619 = vmatpush1.msra.mxu0 0.0
    %620 = vmatprep.subr.mxu0 0.0
    %621 = vmatpush1.msra.mxu0 0.0
    %622 = vmatprep.subr.mxu0 0.0
    %623 = vmatpush1.msra.mxu0 0.0
    %624 = vmatprep.subr.mxu0 0.0
    %625 = vmatpush1.msra.mxu0 0.0
    %626 = vmatprep.subr.mxu0 0.0
    %627 = vmatpush1.msra.mxu0 0.0
    %628 = vmatprep.subr.mxu0 0.0
    %629 = vmatpush1.msra.mxu0 0.0
    %630 = vmatprep.subr.mxu0 0.0
    %631 = vmatpush1.msra.mxu0 0.0
    %632 = vmatprep.subr.mxu0 0.0
    %633 = vmatpush1.msra.mxu0 0.0
    %634 = vmatprep.subr.mxu0 0.0
    %635 = vmatpush1.msra.mxu0 0.0
    %636 = vmatprep.subr.mxu0 0.0
    %637 = vmatpush1.msra.mxu0 0.0
    %638 = vmatprep.subr.mxu0 0.0
    %639 = vmatpush1.msra.mxu0 0.0
    %640 = vmatprep.subr.mxu0 0.0
    %641 = vmatpush1.msra.mxu0 0.0
    %642 = vmatprep.subr.mxu0 0.0
    %643 = vmatpush1.msra.mxu0 0.0
    %644 = vmatprep.subr.mxu0 0.0
    %645 = vmatpush1.msra.mxu0 0.0
    %646 = vmatprep.subr.mxu0 0.0
    %647 = vmatpush1.msra.mxu0 0.0
    %648 = vmatprep.subr.mxu0 0.0
    %649 = vmatpush1.msra.mxu0 0.0
    %650 = vmatprep.subr.mxu0 0.0
    %651 = vmatpush1.msra.mxu0 0.0
    %652 = vmatprep.subr.mxu0 0.0
    %653 = vmatpush1.msra.mxu0 0.0
    %654 = vmatprep.subr.mxu0 0.0
    %655 = vmatpush1.msra.mxu0 0.0
    %656 = vmatprep.subr.mxu0 0.0
    %657 = vmatpush1.msra.mxu0 0.0
    %658 = vmatprep.mubr.f32.mxu0 0.0
    %659 = vmatmul.mubr.f32.gmra.mrb[0].mxu0 %v592
    %v660 = vpop.f32.mrb[0].mxu0
    %v661 = vadd.f32 0.0, %v660
    %v662 = vpop.f32.mrb[0].mxu0
    %663 = vdwg.mxu0
    %v664 = vadd.f32 %v257, %v661
    %v665 = vxor.u32 %v664, 2147483648
    %v666 = vmul.f32 %v665, 1.442695
    %v667 = vpow.pop %v666
    %v668 = vadd.f32 %v667, 1.0
    %v669 = vrcp.pop %v668
    %v670 = vmul.f32 1.0, %v669
    %v671 = vtanh.pop %v664
    %v672 = vsel %vm286, %v671, %v670
    %v673 = vmul.f32 %v672, %v582
    %675 = vrot.lane.b32.xlu0 %v672, 64
    %v676 = vpop.permute.xlu0 %675
    %v678 = vmul.f32 %v672, %v676
    %680 = vrot.lane.b32.xlu0 %v678, 32
    %v681 = vpop.permute.xlu0 %680
    %v683 = vadd.f32 %v673, %v681
    %v684 = vtanh.pop %v683
    %686 = vrot.lane.b32.xlu0 %v684, 64
    %v687 = vpop.permute.xlu0 %686
    %v689 = vmul.f32 %v672, %v687
    %691 = vrot.lane.b32.xlu0 %v689, 32
    %v692 = vpop.permute.xlu0 %691
    %v693 = vsel %vm287, %v692, 0
    %695 = vmatprep.subr.mxu0 0.0
    %696 = vmatpush1.msra.mxu0 %v280
    %697 = vmatprep.subr.mxu0 0.0
    %698 = vmatpush1.msra.mxu0 %v281
    %699 = vmatprep.subr.mxu0 0.0
    %700 = vmatpush1.msra.mxu0 %v282
    %701 = vmatprep.subr.mxu0 0.0
    %702 = vmatpush1.msra.mxu0 %v283
    %703 = vmatprep.subr.mxu0 0.0
    %704 = vmatpush1.msra.mxu0 0.0
    %705 = vmatprep.subr.mxu0 0.0
    %706 = vmatpush1.msra.mxu0 0.0
    %707 = vmatprep.subr.mxu0 0.0
    %708 = vmatpush1.msra.mxu0 0.0
    %709 = vmatprep.subr.mxu0 0.0
    %710 = vmatpush1.msra.mxu0 0.0
    %711 = vmatprep.subr.mxu0 0.0
    %712 = vmatpush1.msra.mxu0 0.0
    %713 = vmatprep.subr.mxu0 0.0
    %714 = vmatpush1.msra.mxu0 0.0
    %715 = vmatprep.subr.mxu0 0.0
    %716 = vmatpush1.msra.mxu0 0.0
    %717 = vmatprep.subr.mxu0 0.0
    %718 = vmatpush1.msra.mxu0 0.0
    %719 = vmatprep.subr.mxu0 0.0
    %720 = vmatpush1.msra.mxu0 0.0
    %721 = vmatprep.subr.mxu0 0.0
    %722 = vmatpush1.msra.mxu0 0.0
    %723 = vmatprep.subr.mxu0 0.0
    %724 = vmatpush1.msra.mxu0 0.0
    %725 = vmatprep.subr.mxu0 0.0
    %726 = vmatpush1.msra.mxu0 0.0
    %727 = vmatprep.subr.mxu0 0.0
    %728 = vmatpush1.msra.mxu0 0.0
    %729 = vmatprep.subr.mxu0 0.0
    %730 = vmatpush1.msra.mxu0 0.0
    %731 = vmatprep.subr.mxu0 0.0
    %732 = vmatpush1.msra.mxu0 0.0
    %733 = vmatprep.subr.mxu0 0.0
    %734 = vmatpush1.msra.mxu0 0.0
    %735 = vmatprep.subr.mxu0 0.0
    %736 = vmatpush1.msra.mxu0 0.0
    %737 = vmatprep.subr.mxu0 0.0
    %738 = vmatpush1.msra.mxu0 0.0
    %739 = vmatprep.subr.mxu0 0.0
    %740 = vmatpush1.msra.mxu0 0.0
    %741 = vmatprep.subr.mxu0 0.0
    %742 = vmatpush1.msra.mxu0 0.0
    %743 = vmatprep.subr.mxu0 0.0
    %744 = vmatpush1.msra.mxu0 0.0
    %745 = vmatprep.subr.mxu0 0.0
    %746 = vmatpush1.msra.mxu0 0.0
    %747 = vmatprep.subr.mxu0 0.0
    %748 = vmatpush1.msra.mxu0 0.0
    %749 = vmatprep.subr.mxu0 0.0
    %750 = vmatpush1.msra.mxu0 0.0
    %751 = vmatprep.subr.mxu0 0.0
    %752 = vmatpush1.msra.mxu0 0.0
    %753 = vmatprep.subr.mxu0 0.0
    %754 = vmatpush1.msra.mxu0 0.0
    %755 = vmatprep.subr.mxu0 0.0
    %756 = vmatpush1.msra.mxu0 0.0
    %757 = vmatprep.subr.mxu0 0.0
    %758 = vmatpush1.msra.mxu0 0.0
    %759 = vmatprep.mubr.f32.mxu0 0.0
    %760 = vmatmul.mubr.f32.gmra.mrb[0].mxu0 %v693
    %v761 = vpop.f32.mrb[0].mxu0
    %v762 = vadd.f32 0.0, %v761
    %v763 = vpop.f32.mrb[0].mxu0
    %764 = vdwg.mxu0
    %v765 = vadd.f32 %v262, %v762
    %v766 = vxor.u32 %v765, 2147483648
    %v767 = vmul.f32 %v766, 1.442695
    %v768 = vpow.pop %v767
    %v769 = vadd.f32 %v768, 1.0
    %v770 = vrcp.pop %v769
    %v771 = vmul.f32 1.0, %v770
    %v772 = vtanh.pop %v765
    %v773 = vsel %vm286, %v772, %v771
    %v774 = vmul.f32 %v773, %v683
    %776 = vrot.lane.b32.xlu0 %v773, 64
    %v777 = vpop.permute.xlu0 %776
    %v779 = vmul.f32 %v773, %v777
    %781 = vrot.lane.b32.xlu0 %v779, 32
    %v782 = vpop.permute.xlu0 %781
    %v784 = vadd.f32 %v774, %v782
    %v785 = vtanh.pop %v784
    %787 = vrot.lane.b32.xlu0 %v785, 64
    %v788 = vpop.permute.xlu0 %787
    %v790 = vmul.f32 %v773, %v788
    %792 = vrot.lane.b32.xlu0 %v790, 32
    %v793 = vpop.permute.xlu0 %792
    %v794 = vsel %vm287, %v793, 0
    %796 = vmatprep.subr.mxu0 0.0
    %797 = vmatpush1.msra.mxu0 %v280
    %798 = vmatprep.subr.mxu0 0.0
    %799 = vmatpush1.msra.mxu0 %v281
    %800 = vmatprep.subr.mxu0 0.0
    %801 = vmatpush1.msra.mxu0 %v282
    %802 = vmatprep.subr.mxu0 0.0
    %803 = vmatpush1.msra.mxu0 %v283
    %804 = vmatprep.subr.mxu0 0.0
    %805 = vmatpush1.msra.mxu0 0.0
    %806 = vmatprep.subr.mxu0 0.0
    %807 = vmatpush1.msra.mxu0 0.0
    %808 = vmatprep.subr.mxu0 0.0
    %809 = vmatpush1.msra.mxu0 0.0
    %810 = vmatprep.subr.mxu0 0.0
    %811 = vmatpush1.msra.mxu0 0.0
    %812 = vmatprep.subr.mxu0 0.0
    %813 = vmatpush1.msra.mxu0 0.0
    %814 = vmatprep.subr.mxu0 0.0
    %815 = vmatpush1.msra.mxu0 0.0
    %816 = vmatprep.subr.mxu0 0.0
    %817 = vmatpush1.msra.mxu0 0.0
    %818 = vmatprep.subr.mxu0 0.0
    %819 = vmatpush1.msra.mxu0 0.0
    %820 = vmatprep.subr.mxu0 0.0
    %821 = vmatpush1.msra.mxu0 0.0
    %822 = vmatprep.subr.mxu0 0.0
    %823 = vmatpush1.msra.mxu0 0.0
    %824 = vmatprep.subr.mxu0 0.0
    %825 = vmatpush1.msra.mxu0 0.0
    %826 = vmatprep.subr.mxu0 0.0
    %827 = vmatpush1.msra.mxu0 0.0
    %828 = vmatprep.subr.mxu0 0.0
    %829 = vmatpush1.msra.mxu0 0.0
    %830 = vmatprep.subr.mxu0 0.0
    %831 = vmatpush1.msra.mxu0 0.0
    %832 = vmatprep.subr.mxu0 0.0
    %833 = vmatpush1.msra.mxu0 0.0
    %834 = vmatprep.subr.mxu0 0.0
    %835 = vmatpush1.msra.mxu0 0.0
    %836 = vmatprep.subr.mxu0 0.0
    %837 = vmatpush1.msra.mxu0 0.0
    %838 = vmatprep.subr.mxu0 0.0
    %839 = vmatpush1.msra.mxu0 0.0
    %840 = vmatprep.subr.mxu0 0.0
    %841 = vmatpush1.msra.mxu0 0.0
    %842 = vmatprep.subr.mxu0 0.0
    %843 = vmatpush1.msra.mxu0 0.0
    %844 = vmatprep.subr.mxu0 0.0
    %845 = vmatpush1.msra.mxu0 0.0
    %846 = vmatprep.subr.mxu0 0.0
    %847 = vmatpush1.msra.mxu0 0.0
    %848 = vmatprep.subr.mxu0 0.0
    %849 = vmatpush1.msra.mxu0 0.0
    %850 = vmatprep.subr.mxu0 0.0
    %851 = vmatpush1.msra.mxu0 0.0
    %852 = vmatprep.subr.mxu0 0.0
    %853 = vmatpush1.msra.mxu0 0.0
    %854 = vmatprep.subr.mxu0 0.0
    %855 = vmatpush1.msra.mxu0 0.0
    %856 = vmatprep.subr.mxu0 0.0
    %857 = vmatpush1.msra.mxu0 0.0
    %858 = vmatprep.subr.mxu0 0.0
    %859 = vmatpush1.msra.mxu0 0.0
    %860 = vmatprep.mubr.f32.mxu0 0.0
    %861 = vmatmul.mubr.f32.gmra.mrb[0].mxu0 %v794
    %v862 = vpop.f32.mrb[0].mxu0
    %v863 = vadd.f32 0.0, %v862
    %v864 = vpop.f32.mrb[0].mxu0
    %865 = vdwg.mxu0
    %v866 = vadd.f32 %v267, %v863
    %v867 = vxor.u32 %v866, 2147483648
    %v868 = vmul.f32 %v867, 1.442695
    %v869 = vpow.pop %v868
    %v870 = vadd.f32 %v869, 1.0
    %v871 = vrcp.pop %v870
    %v872 = vmul.f32 1.0, %v871
    %v873 = vtanh.pop %v866
    %v874 = vsel %vm286, %v873, %v872
    %v875 = vmul.f32 %v874, %v784
    %877 = vrot.lane.b32.xlu0 %v874, 64
    %v878 = vpop.permute.xlu0 %877
    %v880 = vmul.f32 %v874, %v878
    %882 = vrot.lane.b32.xlu0 %v880, 32
    %v883 = vpop.permute.xlu0 %882
    %v885 = vadd.f32 %v875, %v883
    %v886 = vtanh.pop %v885
    %888 = vrot.lane.b32.xlu0 %v886, 64
    %v889 = vpop.permute.xlu0 %888
    %v891 = vmul.f32 %v874, %v889
    %893 = vrot.lane.b32.xlu0 %v891, 32
    %v894 = vpop.permute.xlu0 %893
    %v895 = vsel %vm287, %v894, 0
    %897 = vmatprep.subr.mxu0 0.0
    %898 = vmatpush1.msra.mxu0 %v280
    %899 = vmatprep.subr.mxu0 0.0
    %900 = vmatpush1.msra.mxu0 %v281
    %901 = vmatprep.subr.mxu0 0.0
    %902 = vmatpush1.msra.mxu0 %v282
    %903 = vmatprep.subr.mxu0 0.0
    %904 = vmatpush1.msra.mxu0 %v283
    %905 = vmatprep.subr.mxu0 0.0
    %906 = vmatpush1.msra.mxu0 0.0
    %907 = vmatprep.subr.mxu0 0.0
    %908 = vmatpush1.msra.mxu0 0.0
    %909 = vmatprep.subr.mxu0 0.0
    %910 = vmatpush1.msra.mxu0 0.0
    %911 = vmatprep.subr.mxu0 0.0
    %912 = vmatpush1.msra.mxu0 0.0
    %913 = vmatprep.subr.mxu0 0.0
    %914 = vmatpush1.msra.mxu0 0.0
    %915 = vmatprep.subr.mxu0 0.0
    %916 = vmatpush1.msra.mxu0 0.0
    %917 = vmatprep.subr.mxu0 0.0
    %918 = vmatpush1.msra.mxu0 0.0
    %919 = vmatprep.subr.mxu0 0.0
    %920 = vmatpush1.msra.mxu0 0.0
    %921 = vmatprep.subr.mxu0 0.0
    %922 = vmatpush1.msra.mxu0 0.0
    %923 = vmatprep.subr.mxu0 0.0
    %924 = vmatpush1.msra.mxu0 0.0
    %925 = vmatprep.subr.mxu0 0.0
    %926 = vmatpush1.msra.mxu0 0.0
    %927 = vmatprep.subr.mxu0 0.0
    %928 = vmatpush1.msra.mxu0 0.0
    %929 = vmatprep.subr.mxu0 0.0
    %930 = vmatpush1.msra.mxu0 0.0
    %931 = vmatprep.subr.mxu0 0.0
    %932 = vmatpush1.msra.mxu0 0.0
    %933 = vmatprep.subr.mxu0 0.0
    %934 = vmatpush1.msra.mxu0 0.0
    %935 = vmatprep.subr.mxu0 0.0
    %936 = vmatpush1.msra.mxu0 0.0
    %937 = vmatprep.subr.mxu0 0.0
    %938 = vmatpush1.msra.mxu0 0.0
    %939 = vmatprep.subr.mxu0 0.0
    %940 = vmatpush1.msra.mxu0 0.0
    %941 = vmatprep.subr.mxu0 0.0
    %942 = vmatpush1.msra.mxu0 0.0
    %943 = vmatprep.subr.mxu0 0.0
    %944 = vmatpush1.msra.mxu0 0.0
    %945 = vmatprep.subr.mxu0 0.0
    %946 = vmatpush1.msra.mxu0 0.0
    %947 = vmatprep.subr.mxu0 0.0
    %948 = vmatpush1.msra.mxu0 0.0
    %949 = vmatprep.subr.mxu0 0.0
    %950 = vmatpush1.msra.mxu0 0.0
    %951 = vmatprep.subr.mxu0 0.0
    %952 = vmatpush1.msra.mxu0 0.0
    %953 = vmatprep.subr.mxu0 0.0
    %954 = vmatpush1.msra.mxu0 0.0
    %955 = vmatprep.subr.mxu0 0.0
    %956 = vmatpush1.msra.mxu0 0.0
    %957 = vmatprep.subr.mxu0 0.0
    %958 = vmatpush1.msra.mxu0 0.0
    %959 = vmatprep.subr.mxu0 0.0
    %960 = vmatpush1.msra.mxu0 0.0
    %961 = vmatprep.mubr.f32.mxu0 0.0
    %962 = vmatmul.mubr.f32.gmra.mrb[0].mxu0 %v895
    %v963 = vpop.f32.mrb[0].mxu0
    %v964 = vadd.f32 0.0, %v963
    %v965 = vpop.f32.mrb[0].mxu0
    %966 = vdwg.mxu0
    %v967 = vadd.f32 %v272, %v964
    %v968 = vxor.u32 %v967, 2147483648
    %v969 = vmul.f32 %v968, 1.442695
    %v970 = vpow.pop %v969
    %v971 = vadd.f32 %v970, 1.0
    %v972 = vrcp.pop %v971
    %v973 = vmul.f32 1.0, %v972
    %v974 = vtanh.pop %v967
    %v975 = vsel %vm286, %v974, %v973
    %v976 = vmul.f32 %v975, %v885
    %978 = vrot.lane.b32.xlu0 %v975, 64
    %v979 = vpop.permute.xlu0 %978
    %v981 = vmul.f32 %v975, %v979
    %983 = vrot.lane.b32.xlu0 %v981, 32
    %v984 = vpop.permute.xlu0 %983
    %v986 = vadd.f32 %v976, %v984
    %v987 = vtanh.pop %v986
    %989 = vrot.lane.b32.xlu0 %v987, 64
    %v990 = vpop.permute.xlu0 %989
    %v992 = vmul.f32 %v975, %v990
    %994 = vrot.lane.b32.xlu0 %v992, 32
    %v995 = vpop.permute.xlu0 %994
    %v996 = vsel %vm287, %v995, 0
    %998 = vmatprep.subr.mxu0 0.0
    %999 = vmatpush1.msra.mxu0 %v280
    %1000 = vmatprep.subr.mxu0 0.0
    %1001 = vmatpush1.msra.mxu0 %v281
    %1002 = vmatprep.subr.mxu0 0.0
    %1003 = vmatpush1.msra.mxu0 %v282
    %1004 = vmatprep.subr.mxu0 0.0
    %1005 = vmatpush1.msra.mxu0 %v283
    %1006 = vmatprep.subr.mxu0 0.0
    %1007 = vmatpush1.msra.mxu0 0.0
    %1008 = vmatprep.subr.mxu0 0.0
    %1009 = vmatpush1.msra.mxu0 0.0
    %1010 = vmatprep.subr.mxu0 0.0
    %1011 = vmatpush1.msra.mxu0 0.0
    %1012 = vmatprep.subr.mxu0 0.0
    %1013 = vmatpush1.msra.mxu0 0.0
    %1014 = vmatprep.subr.mxu0 0.0
    %1015 = vmatpush1.msra.mxu0 0.0
    %1016 = vmatprep.subr.mxu0 0.0
    %1017 = vmatpush1.msra.mxu0 0.0
    %1018 = vmatprep.subr.mxu0 0.0
    %1019 = vmatpush1.msra.mxu0 0.0
    %1020 = vmatprep.subr.mxu0 0.0
    %1021 = vmatpush1.msra.mxu0 0.0
    %1022 = vmatprep.subr.mxu0 0.0
    %1023 = vmatpush1.msra.mxu0 0.0
    %1024 = vmatprep.subr.mxu0 0.0
    %1025 = vmatpush1.msra.mxu0 0.0
    %1026 = vmatprep.subr.mxu0 0.0
    %1027 = vmatpush1.msra.mxu0 0.0
    %1028 = vmatprep.subr.mxu0 0.0
    %1029 = vmatpush1.msra.mxu0 0.0
    %1030 = vmatprep.subr.mxu0 0.0
    %1031 = vmatpush1.msra.mxu0 0.0
    %1032 = vmatprep.subr.mxu0 0.0
    %1033 = vmatpush1.msra.mxu0 0.0
    %1034 = vmatprep.subr.mxu0 0.0
    %1035 = vmatpush1.msra.mxu0 0.0
    %1036 = vmatprep.subr.mxu0 0.0
    %1037 = vmatpush1.msra.mxu0 0.0
    %1038 = vmatprep.subr.mxu0 0.0
    %1039 = vmatpush1.msra.mxu0 0.0
    %1040 = vmatprep.subr.mxu0 0.0
    %1041 = vmatpush1.msra.mxu0 0.0
    %1042 = vmatprep.subr.mxu0 0.0
    %1043 = vmatpush1.msra.mxu0 0.0
    %1044 = vmatprep.subr.mxu0 0.0
    %1045 = vmatpush1.msra.mxu0 0.0
    %1046 = vmatprep.subr.mxu0 0.0
    %1047 = vmatpush1.msra.mxu0 0.0
    %1048 = vmatprep.subr.mxu0 0.0
    %1049 = vmatpush1.msra.mxu0 0.0
    %1050 = vmatprep.subr.mxu0 0.0
    %1051 = vmatpush1.msra.mxu0 0.0
    %1052 = vmatprep.subr.mxu0 0.0
    %1053 = vmatpush1.msra.mxu0 0.0
    %1054 = vmatprep.subr.mxu0 0.0
    %1055 = vmatpush1.msra.mxu0 0.0
    %1056 = vmatprep.subr.mxu0 0.0
    %1057 = vmatpush1.msra.mxu0 0.0
    %1058 = vmatprep.subr.mxu0 0.0
    %1059 = vmatpush1.msra.mxu0 0.0
    %1060 = vmatprep.subr.mxu0 0.0
    %1061 = vmatpush1.msra.mxu0 0.0
    %1062 = vmatprep.mubr.f32.mxu0 0.0
    %1063 = vmatmul.mubr.f32.gmra.mrb[0].mxu0 %v996
    %v1064 = vpop.f32.mrb[0].mxu0
    %v1065 = vadd.f32 0.0, %v1064
    %v1066 = vpop.f32.mrb[0].mxu0
    %1067 = vdwg.mxu0
    %v1068 = vadd.f32 %v277, %v1065
    %v1069 = vxor.u32 %v1068, 2147483648
    %v1070 = vmul.f32 %v1069, 1.442695
    %v1071 = vpow.pop %v1070
    %v1072 = vadd.f32 %v1071, 1.0
    %v1073 = vrcp.pop %v1072
    %v1074 = vmul.f32 1.0, %v1073
    %v1075 = vtanh.pop %v1068
    %v1076 = vsel %vm286, %v1075, %v1074
    %v1077 = vmul.f32 %v1076, %v986
    %1079 = vrot.lane.b32.xlu0 %v1076, 64
    %v1080 = vpop.permute.xlu0 %1079
    %v1082 = vmul.f32 %v1076, %v1080
    %1084 = vrot.lane.b32.xlu0 %v1082, 32
    %v1085 = vpop.permute.xlu0 %1084
    %v1087 = vadd.f32 %v1077, %v1085
    %v1088 = vtanh.pop %v1087
    %1090 = vrot.lane.b32.xlu0 %v1088, 64
    %v1091 = vpop.permute.xlu0 %1090
    %v1093 = vmul.f32 %v1076, %v1091
    %v1094 = vld [vmem:[%s1] sm:$0xff]
    %v1095 = vld [vmem:[#allocation6] sm:$0x3f]
    %v1096 = vld [vmem:[#allocation7] sm:$0xff]
    %v1097 = vld [vmem:[#allocation7 + $0x8] sm:$0xff]
    %v1098 = vld [vmem:[#allocation7 + $0x10] sm:$0xff]
    %v1099 = vld [vmem:[#allocation7 + $0x18] sm:$0xff]
    %1101 = vrot.lane.b32.xlu0 %v1093, 32
    %v1102 = vpop.permute.xlu0 %1101
    %v1103 = vsel %vm287, %v1102, 0
    %1105 = vmatprep.subr.mxu0 0.0
    %1106 = vmatpush1.msra.mxu0 %v1096
    %1107 = vmatprep.subr.mxu0 0.0
    %1108 = vmatpush1.msra.mxu0 %v1097
    %1109 = vmatprep.subr.mxu0 0.0
    %1110 = vmatpush1.msra.mxu0 %v1098
    %1111 = vmatprep.subr.mxu0 0.0
    %1112 = vmatpush1.msra.mxu0 %v1099
    %1113 = vmatprep.subr.mxu0 0.0
    %1114 = vmatpush1.msra.mxu0 0.0
    %1115 = vmatprep.subr.mxu0 0.0
    %1116 = vmatpush1.msra.mxu0 0.0
    %1117 = vmatprep.subr.mxu0 0.0
    %1118 = vmatpush1.msra.mxu0 0.0
    %1119 = vmatprep.subr.mxu0 0.0
    %1120 = vmatpush1.msra.mxu0 0.0
    %1121 = vmatprep.subr.mxu0 0.0
    %1122 = vmatpush1.msra.mxu0 0.0
    %1123 = vmatprep.subr.mxu0 0.0
    %1124 = vmatpush1.msra.mxu0 0.0
    %1125 = vmatprep.subr.mxu0 0.0
    %1126 = vmatpush1.msra.mxu0 0.0
    %1127 = vmatprep.subr.mxu0 0.0
    %1128 = vmatpush1.msra.mxu0 0.0
    %1129 = vmatprep.subr.mxu0 0.0
    %1130 = vmatpush1.msra.mxu0 0.0
    %1131 = vmatprep.subr.mxu0 0.0
    %1132 = vmatpush1.msra.mxu0 0.0
    %1133 = vmatprep.subr.mxu0 0.0
    %1134 = vmatpush1.msra.mxu0 0.0
    %1135 = vmatprep.subr.mxu0 0.0
    %1136 = vmatpush1.msra.mxu0 0.0
    %1137 = vmatprep.subr.mxu0 0.0
    %1138 = vmatpush1.msra.mxu0 0.0
    %1139 = vmatprep.subr.mxu0 0.0
    %1140 = vmatpush1.msra.mxu0 0.0
    %1141 = vmatprep.subr.mxu0 0.0
    %1142 = vmatpush1.msra.mxu0 0.0
    %1143 = vmatprep.subr.mxu0 0.0
    %1144 = vmatpush1.msra.mxu0 0.0
    %1145 = vmatprep.subr.mxu0 0.0
    %1146 = vmatpush1.msra.mxu0 0.0
    %1147 = vmatprep.subr.mxu0 0.0
    %1148 = vmatpush1.msra.mxu0 0.0
    %1149 = vmatprep.subr.mxu0 0.0
    %1150 = vmatpush1.msra.mxu0 0.0
    %1151 = vmatprep.subr.mxu0 0.0
    %1152 = vmatpush1.msra.mxu0 0.0
    %1153 = vmatprep.subr.mxu0 0.0
    %1154 = vmatpush1.msra.mxu0 0.0
    %1155 = vmatprep.subr.mxu0 0.0
    %1156 = vmatpush1.msra.mxu0 0.0
    %1157 = vmatprep.subr.mxu0 0.0
    %1158 = vmatpush1.msra.mxu0 0.0
    %1159 = vmatprep.subr.mxu0 0.0
    %1160 = vmatpush1.msra.mxu0 0.0
    %1161 = vmatprep.subr.mxu0 0.0
    %1162 = vmatpush1.msra.mxu0 0.0
    %1163 = vmatprep.subr.mxu0 0.0
    %1164 = vmatpush1.msra.mxu0 0.0
    %1165 = vmatprep.subr.mxu0 0.0
    %1166 = vmatpush1.msra.mxu0 0.0
    %1167 = vmatprep.subr.mxu0 0.0
    %1168 = vmatpush1.msra.mxu0 0.0
    %1169 = vmatprep.mubr.f32.mxu0 0.0
    %1170 = vmatmul.mubr.f32.gmra.mrb[0].mxu0 %v1103
    %v1171 = vpop.f32.mrb[0].mxu0
    %v1172 = vadd.f32 0.0, %v1171
    %v1173 = vpop.f32.mrb[0].mxu0
    %1174 = vdwg.mxu0
    %vm1175 = vcmask 48128
    %v1177 = vsel %vm1175, %v1094, 0
    %vm1179 = vcmask 1045504
    %v1181 = vsel %vm1179, %v1095, 0
    %1183 = vmatprep.subr.mxu0 0.0
    %1184 = vmatpush1.msra.mxu0 %v1181
    %1185 = vmatprep.subr.mxu0 0.0
    %1186 = vmatpush1.msra.mxu0 0.0
    %1187 = vmatprep.subr.mxu0 0.0
    %1188 = vmatpush1.msra.mxu0 0.0
    %1189 = vmatprep.subr.mxu0 0.0
    %1190 = vmatpush1.msra.mxu0 0.0
    %1191 = vmatprep.subr.mxu0 0.0
    %1192 = vmatpush1.msra.mxu0 0.0
    %1193 = vmatprep.subr.mxu0 0.0
    %1194 = vmatpush1.msra.mxu0 0.0
    %1195 = vmatprep.subr.mxu0 0.0
    %1196 = vmatpush1.msra.mxu0 0.0
    %1197 = vmatprep.subr.mxu0 0.0
    %1198 = vmatpush1.msra.mxu0 0.0
    %1199 = vmatprep.subr.mxu0 0.0
    %1200 = vmatpush1.msra.mxu0 0.0
    %1201 = vmatprep.subr.mxu0 0.0
    %1202 = vmatpush1.msra.mxu0 0.0
    %1203 = vmatprep.subr.mxu0 0.0
    %1204 = vmatpush1.msra.mxu0 0.0
    %1205 = vmatprep.subr.mxu0 0.0
    %1206 = vmatpush1.msra.mxu0 0.0
    %1207 = vmatprep.subr.mxu0 0.0
    %1208 = vmatpush1.msra.mxu0 0.0
    %1209 = vmatprep.subr.mxu0 0.0
    %1210 = vmatpush1.msra.mxu0 0.0
    %1211 = vmatprep.subr.mxu0 0.0
    %1212 = vmatpush1.msra.mxu0 0.0
    %1213 = vmatprep.subr.mxu0 0.0
    %1214 = vmatpush1.msra.mxu0 0.0
    %1215 = vmatprep.subr.mxu0 0.0
    %1216 = vmatpush1.msra.mxu0 0.0
    %1217 = vmatprep.subr.mxu0 0.0
    %1218 = vmatpush1.msra.mxu0 0.0
    %1219 = vmatprep.subr.mxu0 0.0
    %1220 = vmatpush1.msra.mxu0 0.0
    %1221 = vmatprep.subr.mxu0 0.0
    %1222 = vmatpush1.msra.mxu0 0.0
    %1223 = vmatprep.subr.mxu0 0.0
    %1224 = vmatpush1.msra.mxu0 0.0
    %1225 = vmatprep.subr.mxu0 0.0
    %1226 = vmatpush1.msra.mxu0 0.0
    %1227 = vmatprep.subr.mxu0 0.0
    %1228 = vmatpush1.msra.mxu0 0.0
    %1229 = vmatprep.subr.mxu0 0.0
    %1230 = vmatpush1.msra.mxu0 0.0
    %1231 = vmatprep.subr.mxu0 0.0
    %1232 = vmatpush1.msra.mxu0 0.0
    %1233 = vmatprep.subr.mxu0 0.0
    %1234 = vmatpush1.msra.mxu0 0.0
    %1235 = vmatprep.subr.mxu0 0.0
    %1236 = vmatpush1.msra.mxu0 0.0
    %1237 = vmatprep.subr.mxu0 0.0
    %1238 = vmatpush1.msra.mxu0 0.0
    %1239 = vmatprep.subr.mxu0 0.0
    %1240 = vmatpush1.msra.mxu0 0.0
    %1241 = vmatprep.subr.mxu0 0.0
    %1242 = vmatpush1.msra.mxu0 0.0
    %1243 = vmatprep.subr.mxu0 0.0
    %1244 = vmatpush1.msra.mxu0 0.0
    %1245 = vmatprep.subr.mxu0 0.0
    %1246 = vmatpush1.msra.mxu0 0.0
    %1247 = vmatprep.mubr.f32.mxu0 0.0
    %1248 = vmatmul.mubr.f32.gmra.mrb[0].mxu0 %v1177
    %v1249 = vpop.f32.mrb[0].mxu0
    %v1250 = vadd.f32 %v1172, %v1249
    %v1251 = vpop.f32.mrb[0].mxu0
    %1252 = vdwg.mxu0
    %v1253 = vld [vmem:[%s6] sm:$0x1]
    %v1255 = vlaneseq
    %v1256 = vshrl.u32 %v1255, 7
    %v1257 = vsub.s32 0, %v1256
    %v1258 = vrot.slane %v1253, %v1257
    %v1260 = vadd.f32 %v1250, %v1258
    %v1261 = vmax.f32 %v1260, 0.0
    %v1262 = vld [vmem:[%s7] sm:$0xff]
    %v1263 = vld [vmem:[%s7 + $0x8] sm:$0xff]
    %v1264 = vld [vmem:[%s7 + $0x10] sm:$0xff]
    %v1265 = vld [vmem:[%s7 + $0x18] sm:$0xff]
    %v1266 = vld [vmem:[%s7 + $0x20] sm:$0xff]
    %v1267 = vld [vmem:[%s7 + $0x28] sm:$0xff]
    %v1268 = vld [vmem:[%s7 + $0x30] sm:$0xff]
    %v1269 = vld [vmem:[%s7 + $0x38] sm:$0xff]
    %v1270 = vld [vmem:[%s7 + $0x40] sm:$0xff]
    %v1271 = vld [vmem:[%s7 + $0x48] sm:$0xff]
    %v1272 = vld [vmem:[%s7 + $0x50] sm:$0xff]
    %v1273 = vld [vmem:[%s7 + $0x58] sm:$0xff]
    %v1274 = vld [vmem:[%s7 + $0x60] sm:$0xff]
    %v1275 = vld [vmem:[%s7 + $0x68] sm:$0xff]
    %v1276 = vld [vmem:[%s7 + $0x70] sm:$0xff]
    %v1277 = vld [vmem:[%s7 + $0x78] sm:$0xff]
    %v1278 = vld [vmem:[%s8] sm:$0x1]
    %v1280 = vlaneseq
    %v1281 = vshrl.u32 %v1280, 7
    %v1282 = vsub.s32 0, %v1281
    %v1283 = vrot.slane %v1278, %v1282
    %1285 = vmatprep.subr.mxu0 0.0
    %1286 = vmatpush1.msra.mxu0 %v1262
    %1287 = vmatprep.subr.mxu0 0.0
    %1288 = vmatpush1.msra.mxu0 %v1263
    %1289 = vmatprep.subr.mxu0 0.0
    %1290 = vmatpush1.msra.mxu0 %v1264
    %1291 = vmatprep.subr.mxu0 0.0
    %1292 = vmatpush1.msra.mxu0 %v1265
    %1293 = vmatprep.subr.mxu0 0.0
    %1294 = vmatpush1.msra.mxu0 %v1266
    %1295 = vmatprep.subr.mxu0 0.0
    %1296 = vmatpush1.msra.mxu0 %v1267
    %1297 = vmatprep.subr.mxu0 0.0
    %1298 = vmatpush1.msra.mxu0 %v1268
    %1299 = vmatprep.subr.mxu0 0.0
    %1300 = vmatpush1.msra.mxu0 %v1269
    %1301 = vmatprep.subr.mxu0 0.0
    %1302 = vmatpush1.msra.mxu0 %v1270
    %1303 = vmatprep.subr.mxu0 0.0
    %1304 = vmatpush1.msra.mxu0 %v1271
    %1305 = vmatprep.subr.mxu0 0.0
    %1306 = vmatpush1.msra.mxu0 %v1272
    %1307 = vmatprep.subr.mxu0 0.0
    %1308 = vmatpush1.msra.mxu0 %v1273
    %1309 = vmatprep.subr.mxu0 0.0
    %1310 = vmatpush1.msra.mxu0 %v1274
    %1311 = vmatprep.subr.mxu0 0.0
    %1312 = vmatpush1.msra.mxu0 %v1275
    %1313 = vmatprep.subr.mxu0 0.0
    %1314 = vmatpush1.msra.mxu0 %v1276
    %1315 = vmatprep.subr.mxu0 0.0
    %1316 = vmatpush1.msra.mxu0 %v1277
    %1317 = vmatprep.subr.mxu0 0.0
    %1318 = vmatpush1.msra.mxu0 0.0
    %1319 = vmatprep.subr.mxu0 0.0
    %1320 = vmatpush1.msra.mxu0 0.0
    %1321 = vmatprep.subr.mxu0 0.0
    %1322 = vmatpush1.msra.mxu0 0.0
    %1323 = vmatprep.subr.mxu0 0.0
    %1324 = vmatpush1.msra.mxu0 0.0
    %1325 = vmatprep.subr.mxu0 0.0
    %1326 = vmatpush1.msra.mxu0 0.0
    %1327 = vmatprep.subr.mxu0 0.0
    %1328 = vmatpush1.msra.mxu0 0.0
    %1329 = vmatprep.subr.mxu0 0.0
    %1330 = vmatpush1.msra.mxu0 0.0
    %1331 = vmatprep.subr.mxu0 0.0
    %1332 = vmatpush1.msra.mxu0 0.0
    %1333 = vmatprep.subr.mxu0 0.0
    %1334 = vmatpush1.msra.mxu0 0.0
    %1335 = vmatprep.subr.mxu0 0.0
    %1336 = vmatpush1.msra.mxu0 0.0
    %1337 = vmatprep.subr.mxu0 0.0
    %1338 = vmatpush1.msra.mxu0 0.0
    %1339 = vmatprep.subr.mxu0 0.0
    %1340 = vmatpush1.msra.mxu0 0.0
    %1341 = vmatprep.subr.mxu0 0.0
    %1342 = vmatpush1.msra.mxu0 0.0
    %1343 = vmatprep.subr.mxu0 0.0
    %1344 = vmatpush1.msra.mxu0 0.0
    %1345 = vmatprep.subr.mxu0 0.0
    %1346 = vmatpush1.msra.mxu0 0.0
    %1347 = vmatprep.subr.mxu0 0.0
    %1348 = vmatpush1.msra.mxu0 0.0
    %1349 = vmatprep.mubr.f32.mxu0 0.0
    %1350 = vmatmul.mubr.f32.gmra.mrb[0].mxu0 %v1261
    %v1351 = vpop.f32.mrb[0].mxu0
    %v1352 = vadd.f32 %v1283, %v1351
    %v1353 = vpop.f32.mrb[0].mxu0
    %1354 = vdwg.mxu0
    %1355 = vst [vmem:[%s9] sm:$0xff] %v1352
    // Predicated region
    $region54: #{sku_forward.1} parent=1 // pred_check
      _
    $region55: #{sku_forward.1} parent=1 // pred_check_branch
      %1357 = sbr.rel (0) target = $region57
    $region56: #{sku_forward.1} parent=1 // pred_region
      _
    $region57: #{sku_forward.1} parent=1 // pred_fallthru
      _
    // Predicated region
    $region58: #{sku_forward.1} parent=1 // pred_check
      _
    $region59: #{sku_forward.1} parent=1 // pred_check_branch
      %1359 = sbr.rel (0) target = $region61
    $region60: #{sku_forward.1} parent=1 // pred_region
      _
    $region61: #{sku_forward.1} parent=1 // pred_fallthru
      _
    %1360 = vsyncpa [#allocation3], 1
    %1361 = vsyncpa [#allocation5], 1
    %1362 = vsyncpa [#allocation8], 1

</llo_original>
